<compile_context>
chip_gen: v7x
topology: tpu7x:2x2x1
jax: 0.10.0
libtpu: 0.0.40
codegen_flags: <defaults>
</compile_context>

<pallas_src>
import math
from functools import partial

import jax
import jax.numpy as jnp
from jax import lax
from jax.experimental import pallas as pl
from jax.experimental.pallas import tpu as pltpu


def _round_up(x, m):
    return (x + m - 1) // m * m


def _vmem_limit_bytes():
    """Per-generation scoped-VMEM budget: ~3/4 of physical capacity
    (≈96 MiB on v5e/v6e, ≈48 MiB on v7x)."""
    try:
        cap = int(pltpu.get_tpu_info().vmem_capacity_bytes)
    except Exception:
        cap = 128 * 1024 * 1024
    return cap * 3 // 4


def _mha_kernel(h, d_k, tq, tkv, mask_kind, cdt, *refs):
    if mask_kind in ("pad", "dense"):
        (q_ref, k_ref, v_ref,
         wq_ref, bq_ref, wk_ref, bk_ref, wv_ref, bv_ref, wo_ref, bo_ref,
         mask_ref, out_ref, kc_s, vc_s, ctx_s) = refs
    else:
        (q_ref, k_ref, v_ref,
         wq_ref, bq_ref, wk_ref, bk_ref, wv_ref, bv_ref, wo_ref, bo_ref,
         out_ref, kc_s, vc_s, ctx_s) = refs
        mask_ref = None

    qi = pl.program_id(1)
    Sp = kc_s.shape[0]          # padded sequence length
    n_kv = Sp // tkv
    neg_big = jnp.float32(-1e9)

    # ------------------------------------------------------------- K / V
    # Projected K/V are computed ONCE per batch (first q tile) and persist in
    # cdt VMEM scratch across all q tiles (q-tile grid axis is "arbitrary").
    # Projection runs per KV block so f32 intermediates stay (tkv, D).
    def _project_kv(j):
        start = j * tkv if isinstance(j, int) else pl.multiple_of(j * tkv, tkv)
        xk = k_ref[0, pl.ds(start, tkv), :]
        xv = v_ref[0, pl.ds(start, tkv), :]
        kc_s[pl.ds(start, tkv), :] = (
            jnp.dot(xk, wk_ref[...], preferred_element_type=jnp.float32)
            + bk_ref[...]).astype(cdt)
        vc_s[pl.ds(start, tkv), :] = (
            jnp.dot(xv, wv_ref[...], preferred_element_type=jnp.float32)
            + bv_ref[...]).astype(cdt)

    @pl.when(qi == 0)
    def _():
        if n_kv == 1:
            _project_kv(0)
        else:
            @pl.loop(0, n_kv)
            def _(j):
                _project_kv(j)

    # --------------------------------------------------------------- Q
    # Wq / bq were pre-scaled by 1/sqrt(d_k) on the host; f32 accumulate.
    Qc = (jnp.dot(q_ref[0], wq_ref[...], preferred_element_type=jnp.float32)
          + bq_ref[...]).astype(cdt)

    # ------------------------------------------------ per-head flash loop
    for hd in range(h):
        sl = slice(hd * d_k, (hd + 1) * d_k)
        qh = Qc[:, sl]                                   # (tq, d_k) cdt

        def kv_step(j, carry, sl=sl, qh=qh):
            m, l, acc = carry
            start = (j * tkv if isinstance(j, int)
                     else pl.multiple_of(j * tkv, tkv))
            kh = kc_s[pl.ds(start, tkv), sl]             # (tkv, d_k) cdt
            vh = vc_s[pl.ds(start, tkv), sl]
            # qh @ kh.T without materializing a transpose (native MXU path).
            s = lax.dot_general(qh, kh, (((1,), (1,)), ((), ())),
                                preferred_element_type=jnp.float32)
            if mask_kind == "causal":
                row = qi * tq + lax.broadcasted_iota(jnp.int32, (tq, tkv), 0)
                col = start + lax.broadcasted_iota(jnp.int32, (tq, tkv), 1)
                s = jnp.where(row >= col, s, neg_big)
            elif mask_kind == "pad":
                keep = mask_ref[0, :, pl.ds(start, tkv)] != 0   # (1, tkv)
                s = jnp.where(keep, s, neg_big)
            elif mask_kind == "dense":
                keep = mask_ref[0, :, pl.ds(start, tkv)] != 0   # (tq, tkv)
                s = jnp.where(keep, s, neg_big)
            # Online softmax kept in f32 (v5e has no bf16 VPU/EUP).
            m_new = jnp.maximum(m, jnp.max(s, axis=-1, keepdims=True))
            alpha = jnp.exp(m - m_new)
            p = jnp.exp(s - m_new)
            l_new = alpha * l + jnp.sum(p, axis=-1, keepdims=True)
            acc_new = alpha * acc + jnp.dot(p.astype(cdt), vh,
                                            preferred_element_type=jnp.float32)
            return m_new, l_new, acc_new

        carry0 = (jnp.full((tq, 1), -jnp.inf, jnp.float32),
                  jnp.zeros((tq, 1), jnp.float32),
                  jnp.zeros((tq, d_k), jnp.float32))
        if n_kv == 1:
            _, l_fin, acc_fin = kv_step(0, carry0)
        else:
            if mask_kind == "causal":
                # Skip fully-masked KV blocks: only blocks whose first key is
                # <= this tile's last query row can contribute.
                n_live = jnp.minimum(((qi + 1) * tq - 1) // tkv + 1, n_kv)
            else:
                n_live = n_kv
            _, l_fin, acc_fin = lax.fori_loop(0, n_live, kv_step, carry0)

        # pl.reciprocal(approx=True): ~2^-12 rel error, below bf16 rounding of
        # the staged context.  Fully-masked rows -> uniform attention (matches
        # the PyTorch masked_fill(-1e9) reference).
        ctx_s[:, sl] = (acc_fin * pl.reciprocal(l_fin, approx=True)).astype(cdt)

    # ------------------------------------------------ output projection
    # One full-D-contraction GEMM (full MXU depth) instead of h skinny
    # d_k-contraction folds; the staging buffer lives in VMEM, not vregs.
    out = jnp.dot(ctx_s[...], wo_ref[...], preferred_element_type=jnp.float32)
    out_ref[0] = (out + bo_ref[...]).astype(out_ref.dtype)


def multi_headed_attention(q, k, v, params, h, mask=None, causal=False,
                           mask_mode="auto", compute_dtype=jnp.bfloat16,
                           out_dtype=jnp.float32, q_tile=None, kv_tile=None):
    """Annotated-Transformer MultiHeadedAttention forward (eval mode).

    params: dict wq,bq,wk,bk,wv,bv,wo,bo in PyTorch nn.Linear layout
    (weight (out,in), bias (out,)).  `mask` may be None, (B,S)/(B,1,S) key
    padding, or (S,S)/(B,S,S) dense (1 = attend, 0 = masked); `mask_mode` in
    {"auto","pad","dense"} disambiguates 2-D masks when B == S.
    `causal=True` generates the causal mask in-kernel (no dense mask in HBM).
    """
    B, S, D = q.shape
    assert D % h == 0
    d_k = D // h
    cdt = compute_dtype
    assert not (causal and mask is not None), \
        "pass either causal=True or an explicit mask"

    # ---- tile selection + host-side padding of S (no q_tile = S fallback:
    # tiles stay sublane/lane aligned and VMEM-bounded for long sequences).
    if q_tile is None:
        q_tile = min(_round_up(S, 8), 256)
    if kv_tile is None:
        kv_tile = min(_round_up(S, 8), 512)
    assert q_tile % 8 == 0 and kv_tile % 8 == 0
    Sp = _round_up(S, math.lcm(q_tile, kv_tile))
    n_q = Sp // q_tile

    scale = 1.0 / math.sqrt(d_k)
    # Pre-transpose weights once on the host ((in, out) feeds the MXU
    # directly) and fold the 1/sqrt(d_k) score scale into Wq / bq.
    wqt = (params["wq"] * scale).T.astype(cdt)
    wkt = params["wk"].T.astype(cdt)
    wvt = params["wv"].T.astype(cdt)
    wot = params["wo"].T.astype(cdt)
    bq = (params["bq"] * scale).reshape(1, D).astype(jnp.float32)
    bk = params["bk"].reshape(1, D).astype(jnp.float32)
    bv = params["bv"].reshape(1, D).astype(jnp.float32)
    bo = params["bo"].reshape(1, D).astype(jnp.float32)

    def pad_seq(x):
        return x if Sp == S else jnp.pad(x, ((0, 0), (0, Sp - S), (0, 0)))

    qc = pad_seq(q.astype(cdt))
    kc = pad_seq(k.astype(cdt))
    vc = pad_seq(v.astype(cdt))

    # ---- mask normalization (int8; dense f32 masks never shipped) ----------
    m8 = None
    if causal:
        mask_kind = "causal"   # in-kernel; padded keys are in every real
                               # row's future, padded rows are sliced off.
    elif mask is None:
        if Sp == S:
            mask_kind = "none"
        else:                  # mask out the padded keys
            mask_kind = "pad"
            m8 = jnp.broadcast_to(
                (jnp.arange(Sp) < S).astype(jnp.int8)[None, None, :],
                (B, 1, Sp))
    else:
        m = jnp.asarray(mask)
        if m.ndim == 2:
            if mask_mode == "auto":
                if m.shape == (B, S) and m.shape != (S, S):
                    mask_mode = "pad"
                elif m.shape == (S, S) and m.shape != (B, S):
                    mask_mode = "dense"
                else:
                    raise ValueError(
                        "ambiguous 2-D mask (B == S); pass mask_mode=")
            if mask_mode == "pad":
                assert m.shape == (B, S), f"bad pad mask shape {m.shape}"
                m = m[:, None, :]
            else:
                assert m.shape == (S, S), f"bad dense mask shape {m.shape}"
                m = jnp.broadcast_to(m[None], (B, S, S))
        if m.shape == (B, 1, S):
            mask_kind = "pad"
            m8 = (m != 0).astype(jnp.int8)
            if Sp != S:
                m8 = jnp.pad(m8, ((0, 0), (0, 0), (0, Sp - S)))
        elif m.shape == (B, S, S):
            mask_kind = "dense"
            m8 = (m != 0).astype(jnp.int8)
            if Sp != S:
                m8 = jnp.pad(m8, ((0, 0), (0, Sp - S), (0, Sp - S)))
        else:
            raise ValueError(f"unsupported mask shape {m.shape}")

    # ---- specs --------------------------------------------------------------
    x_q_spec = pl.BlockSpec((1, q_tile, D), lambda b, qi: (b, qi, 0))
    x_kv_spec = pl.BlockSpec((1, Sp, D), lambda b, qi: (b, 0, 0))
    # Constant-index weights/biases: single-buffered (no pipelining is lost
    # since the block index never changes; halves their VMEM footprint).
    w_spec = pl.BlockSpec((D, D), lambda b, qi: (0, 0),
                          pipeline_mode=pl.Buffered(1))
    b_spec = pl.BlockSpec((1, D), lambda b, qi: (0, 0),
                          pipeline_mode=pl.Buffered(1))
    out_spec = pl.BlockSpec((1, q_tile, D), lambda b, qi: (b, qi, 0))

    in_specs = [x_q_spec, x_kv_spec, x_kv_spec,
                w_spec, b_spec, w_spec, b_spec, w_spec, b_spec, w_spec, b_spec]
    operands = [qc, kc, vc, wqt, bq, wkt, bk, wvt, bv, wot, bo]
    if m8 is not None:
        if mask_kind == "pad":
            in_specs.append(pl.BlockSpec((1, 1, Sp), lambda b, qi: (b, 0, 0)))
        else:
            in_specs.append(pl.BlockSpec((1, q_tile, Sp),
                                         lambda b, qi: (b, qi, 0)))
        operands.append(m8)

    kernel = partial(_mha_kernel, h, d_k, q_tile, kv_tile, mask_kind, cdt)

    out = pl.pallas_call(
        kernel,
        out_shape=jax.ShapeDtypeStruct((B, Sp, D), out_dtype),
        grid_spec=pltpu.PrefetchScalarGridSpec(
            num_scalar_prefetch=0,
            grid=(B, n_q),
            in_specs=in_specs,
            out_specs=out_spec,
            scratch_shapes=[pltpu.VMEM((Sp, D), cdt),       # projected K
                            pltpu.VMEM((Sp, D), cdt),       # projected V
                            pltpu.VMEM((q_tile, D), cdt)],  # ctx staging
        ),
        compiler_params=pltpu.CompilerParams(
            # batch "parallel" (megacore shards batches; each core fetches a
            # batch's K/V once), q-tile "arbitrary" so K/V scratch persists.
            dimension_semantics=("parallel", "arbitrary"),
            vmem_limit_bytes=_vmem_limit_bytes()),
    )(*operands)
    return out[:, :S, :] if Sp != S else out


# --------------------------------------------------------------------------
# References
# --------------------------------------------------------------------------
def _reference_f32(q, k, v, params, h, causal=False, mask=None):
    """Pure-f32 JAX reference mirroring the PyTorch forward (eval mode)."""
    B, S, D = q.shape
    d_k = D // h

    def lin(x, w, b):
        return x @ w.T + b

    Q = lin(q, params["wq"], params["bq"]).reshape(B, S, h, d_k).transpose(0, 2, 1, 3)
    K = lin(k, params["wk"], params["bk"]).reshape(B, S, h, d_k).transpose(0, 2, 1, 3)
    V = lin(v, params["wv"], params["bv"]).reshape(B, S, h, d_k).transpose(0, 2, 1, 3)

    scores = jnp.einsum("bhqd,bhkd->bhqk", Q, K) / math.sqrt(d_k)
    if causal:
        keep = jnp.tril(jnp.ones((S, S), bool))
        scores = jnp.where(keep[None, None], scores, -1e9)
    elif mask is not None:
        m = jnp.asarray(mask).reshape(B, 1, -1, S)
        scores = jnp.where(m == 0, -1e9, scores)
    p = jax.nn.softmax(scores, axis=-1)
    ctx = jnp.einsum("bhqk,bhkd->bhqd", p, V)
    ctx = ctx.transpose(0, 2, 1, 3).reshape(B, S, D)
    return lin(ctx, params["wo"], params["bo"])


def _reference_mixed(q, k, v, params, h, causal=False, mask=None,
                     cdt=jnp.bfloat16):
    """Reference with the same bf16-matmul / f32-accumulate split as the kernel."""
    B, S, D = q.shape
    d_k = D // h
    scale = 1.0 / math.sqrt(d_k)

    wqt = (params["wq"] * scale).T.astype(cdt)
    wkt = params["wk"].T.astype(cdt)
    wvt = params["wv"].T.astype(cdt)
    wot = params["wo"].T.astype(cdt)

    def mm(a, b):
        return jnp.dot(a, b, preferred_element_type=jnp.float32)

    Q = mm(q.astype(cdt), wqt) + (params["bq"] * scale)
    K = mm(k.astype(cdt), wkt) + params["bk"]
    V = mm(v.astype(cdt), wvt) + params["bv"]
    Qc, Kc, Vc = Q.astype(cdt), K.astype(cdt), V.astype(cdt)

    if causal:
        keep = jnp.tril(jnp.ones((S, S), bool))[None]
    elif mask is not None:
        keep = (jnp.asarray(mask).reshape(B, -1, S) != 0)
    else:
        keep = None

    ctx = jnp.zeros((B, S, D), jnp.float32)
    for hd in range(h):
        sl = slice(hd * d_k, (hd + 1) * d_k)
        s = jnp.einsum("bqd,bkd->bqk", Qc[:, :, sl], Kc[:, :, sl],
                       preferred_element_type=jnp.float32)
        if keep is not None:
            s = jnp.where(keep, s, -1e9)
        p = jax.nn.softmax(s, axis=-1)
        ctx = ctx.at[:, :, sl].set(
            jnp.einsum("bqk,bkd->bqd", p.astype(cdt), Vc[:, :, sl],
                       preferred_element_type=jnp.float32))
    return mm(ctx.astype(cdt), wot) + params["bo"]


if __name__ == "__main__":
    B, S, h, d_model = 2, 8, 4, 32

    key = jax.random.PRNGKey(0)
    keys = jax.random.split(key, 16)
    std = 1.0 / math.sqrt(d_model)
    params = {
        "wq": jax.random.normal(keys[0], (d_model, d_model), jnp.float32) * std,
        "bq": jax.random.normal(keys[1], (d_model,), jnp.float32) * std,
        "wk": jax.random.normal(keys[2], (d_model, d_model), jnp.float32) * std,
        "bk": jax.random.normal(keys[3], (d_model,), jnp.float32) * std,
        "wv": jax.random.normal(keys[4], (d_model, d_model), jnp.float32) * std,
        "bv": jax.random.normal(keys[5], (d_model,), jnp.float32) * std,
        "wo": jax.random.normal(keys[6], (d_model, d_model), jnp.float32) * std,
        "bo": jax.random.normal(keys[7], (d_model,), jnp.float32) * std,
    }

    q = jax.random.normal(keys[8], (B, S, d_model), jnp.float32)
    k = jax.random.normal(keys[9], (B, S, d_model), jnp.float32)
    v = jax.random.normal(keys[10], (B, S, d_model), jnp.float32)

    # 1) Causal attention (mask generated in-kernel), single KV block.
    out = multi_headed_attention(q, k, v, params, h, causal=True)
    out = jax.block_until_ready(out)
    assert out.shape == (B, S, d_model)
    assert jnp.allclose(out, _reference_mixed(q, k, v, params, h, causal=True),
                        atol=2e-2, rtol=2e-2), "causal: mixed-precision mismatch"
    assert jnp.allclose(out, _reference_f32(q, k, v, params, h, causal=True),
                        atol=1e-1, rtol=1e-1), "causal: f32 mismatch"

    # 2) Key-padding mask (B, 1, S), int8 in HBM.
    lens = jnp.array([5, 8])
    pad_mask = (jnp.arange(S)[None, None, :] < lens[:, None, None]).astype(jnp.int32)
    out_m = jax.block_until_ready(
        multi_headed_attention(q, k, v, params, h, mask=pad_mask))
    assert jnp.allclose(out_m,
                        _reference_mixed(q, k, v, params, h, mask=pad_mask),
                        atol=2e-2, rtol=2e-2), "pad: mixed-precision mismatch"
    assert jnp.allclose(out_m,
                        _reference_f32(q, k, v, params, h, mask=pad_mask),
                        atol=1e-1, rtol=1e-1), "pad: f32 mismatch"

    # 3) Longer sequence: exercises multi-block online softmax, causal KV-block
    #    skipping, and K/V-scratch reuse across q tiles.
    S2 = 256
    q2 = jax.random.normal(keys[11], (B, S2, d_model), jnp.float32)
    k2 = jax.random.normal(keys[12], (B, S2, d_model), jnp.float32)
    v2 = jax.random.normal(keys[13], (B, S2, d_model), jnp.float32)
    out2 = jax.block_until_ready(
        multi_headed_attention(q2, k2, v2, params, h, causal=True,
                               q_tile=128, kv_tile=128))
    assert out2.shape == (B, S2, d_model)
    assert jnp.allclose(out2,
                        _reference_mixed(q2, k2, v2, params, h, causal=True),
                        atol=2e-2, rtol=2e-2), "long: mixed-precision mismatch"
    assert jnp.allclose(out2,
                        _reference_f32(q2, k2, v2, params, h, causal=True),
                        atol=1e-1, rtol=1e-1), "long: f32 mismatch"

    print("KERNEL_OK")
</pallas_src>

<mosaic_0001>
module attributes {stable_mosaic.version = 11 : i64} {
  func.func @_mha_kernel(%arg0: i32, %arg1: i32, %arg2: memref<1x8x32xbf16, #tpu.memory_space<vmem>>, %arg3: memref<1x8x32xbf16, #tpu.memory_space<vmem>>, %arg4: memref<1x8x32xbf16, #tpu.memory_space<vmem>>, %arg5: memref<32x32xbf16, #tpu.memory_space<vmem>>, %arg6: memref<1x32xf32, #tpu.memory_space<vmem>>, %arg7: memref<32x32xbf16, #tpu.memory_space<vmem>>, %arg8: memref<1x32xf32, #tpu.memory_space<vmem>>, %arg9: memref<32x32xbf16, #tpu.memory_space<vmem>>, %arg10: memref<1x32xf32, #tpu.memory_space<vmem>>, %arg11: memref<32x32xbf16, #tpu.memory_space<vmem>>, %arg12: memref<1x32xf32, #tpu.memory_space<vmem>>, %arg13: memref<1x8x32xf32, #tpu.memory_space<vmem>>, %arg14: memref<8x32xbf16, #tpu.memory_space<vmem>>, %arg15: memref<8x32xbf16, #tpu.memory_space<vmem>>, %arg16: memref<8x32xbf16, #tpu.memory_space<vmem>>) attributes {dimension_semantics = [#tpu.dimension_semantics<parallel>, #tpu.dimension_semantics<arbitrary>], iteration_bounds = array<i64: 2, 1>, scalar_prefetch = 0 : i64, scratch_operands = 3 : i64, tpu.core_type = #tpu.core_type<tc>, window_params = [{transform_indices = @transform_0, window_bounds = array<i64: 1, 8, 32>}, {transform_indices = @transform_1, window_bounds = array<i64: 1, 8, 32>}, {transform_indices = @transform_2, window_bounds = array<i64: 1, 8, 32>}, {pipeline_mode = #tpu.pipeline_mode<synchronous>, transform_indices = @transform_3, window_bounds = array<i64: 32, 32>}, {pipeline_mode = #tpu.pipeline_mode<synchronous>, transform_indices = @transform_4, window_bounds = array<i64: 1, 32>}, {pipeline_mode = #tpu.pipeline_mode<synchronous>, transform_indices = @transform_5, window_bounds = array<i64: 32, 32>}, {pipeline_mode = #tpu.pipeline_mode<synchronous>, transform_indices = @transform_6, window_bounds = array<i64: 1, 32>}, {pipeline_mode = #tpu.pipeline_mode<synchronous>, transform_indices = @transform_7, window_bounds = array<i64: 32, 32>}, {pipeline_mode = #tpu.pipeline_mode<synchronous>, transform_indices = @transform_8, window_bounds = array<i64: 1, 32>}, {pipeline_mode = #tpu.pipeline_mode<synchronous>, transform_indices = @transform_9, window_bounds = array<i64: 32, 32>}, {pipeline_mode = #tpu.pipeline_mode<synchronous>, transform_indices = @transform_10, window_bounds = array<i64: 1, 32>}, {transform_indices = @transform_11, window_bounds = array<i64: 1, 8, 32>}]} {
    %c0_i32 = arith.constant 0 : i32
    %0 = arith.cmpi eq, %arg1, %c0_i32 : i32
    %1 = arith.extui %0 : i1 to i32
    %c0_i32_0 = arith.constant 0 : i32
    %2 = arith.cmpi ne, %1, %c0_i32_0 : i32
    scf.if %2 {
      %c0_77 = arith.constant 0 : index
      %c0_78 = arith.constant 0 : index
      %c0_79 = arith.constant 0 : index
      %176 = vector.load %arg3[%c0_77, %c0_78, %c0_79] : memref<1x8x32xbf16, #tpu.memory_space<vmem>>, vector<1x8x32xbf16>
      %177 = vector.shape_cast %176 : vector<1x8x32xbf16> to vector<8x32xbf16>
      %c0_80 = arith.constant 0 : index
      %c0_81 = arith.constant 0 : index
      %c0_82 = arith.constant 0 : index
      %178 = vector.load %arg4[%c0_80, %c0_81, %c0_82] : memref<1x8x32xbf16, #tpu.memory_space<vmem>>, vector<1x8x32xbf16>
      %179 = vector.shape_cast %178 : vector<1x8x32xbf16> to vector<8x32xbf16>
      %c0_83 = arith.constant 0 : index
      %c0_84 = arith.constant 0 : index
      %180 = vector.load %arg7[%c0_83, %c0_84] : memref<32x32xbf16, #tpu.memory_space<vmem>>, vector<32x32xbf16>
      %cst_85 = arith.constant dense<0.000000e+00> : vector<8x32xf32>
      %181 = tpu.matmul %177, %180, %cst_85 {dimension_numbers = #tpu.dot_dimension_numbers<[1], [0], [0], [1], [0, 0, 1, 1], [], []>} : vector<8x32xbf16>, vector<32x32xbf16>, vector<8x32xf32> -> vector<8x32xf32>
      %c0_86 = arith.constant 0 : index
      %c0_87 = arith.constant 0 : index
      %182 = vector.load %arg8[%c0_86, %c0_87] : memref<1x32xf32, #tpu.memory_space<vmem>>, vector<1x32xf32>
      %183 = vector.broadcast %182 : vector<1x32xf32> to vector<8x32xf32>
      %184 = arith.addf %181, %183 : vector<8x32xf32>
      %185 = arith.truncf %184 : vector<8x32xf32> to vector<8x32xbf16>
      %c0_88 = arith.constant 0 : index
      %c0_89 = arith.constant 0 : index
      %186 = vector.load %arg14[%c0_88, %c0_89] : memref<8x32xbf16, #tpu.memory_space<vmem>>, vector<8x32xbf16>
      tpu.vector_store %arg14[%c0_88, %c0_89], %185 {strides = array<i32>} : memref<8x32xbf16, #tpu.memory_space<vmem>>, vector<8x32xbf16>,
      %c0_90 = arith.constant 0 : index
      %c0_91 = arith.constant 0 : index
      %187 = vector.load %arg9[%c0_90, %c0_91] : memref<32x32xbf16, #tpu.memory_space<vmem>>, vector<32x32xbf16>
      %cst_92 = arith.constant dense<0.000000e+00> : vector<8x32xf32>
      %188 = tpu.matmul %179, %187, %cst_92 {dimension_numbers = #tpu.dot_dimension_numbers<[1], [0], [0], [1], [0, 0, 1, 1], [], []>} : vector<8x32xbf16>, vector<32x32xbf16>, vector<8x32xf32> -> vector<8x32xf32>
      %c0_93 = arith.constant 0 : index
      %c0_94 = arith.constant 0 : index
      %189 = vector.load %arg10[%c0_93, %c0_94] : memref<1x32xf32, #tpu.memory_space<vmem>>, vector<1x32xf32>
      %190 = vector.broadcast %189 : vector<1x32xf32> to vector<8x32xf32>
      %191 = arith.addf %188, %190 : vector<8x32xf32>
      %192 = arith.truncf %191 : vector<8x32xf32> to vector<8x32xbf16>
      %c0_95 = arith.constant 0 : index
      %c0_96 = arith.constant 0 : index
      %193 = vector.load %arg15[%c0_95, %c0_96] : memref<8x32xbf16, #tpu.memory_space<vmem>>, vector<8x32xbf16>
      tpu.vector_store %arg15[%c0_95, %c0_96], %192 {strides = array<i32>} : memref<8x32xbf16, #tpu.memory_space<vmem>>, vector<8x32xbf16>,
    } else {
    }
    %c0 = arith.constant 0 : index
    %c0_1 = arith.constant 0 : index
    %c0_2 = arith.constant 0 : index
    %3 = vector.load %arg2[%c0, %c0_1, %c0_2] : memref<1x8x32xbf16, #tpu.memory_space<vmem>>, vector<1x8x32xbf16>
    %4 = vector.shape_cast %3 : vector<1x8x32xbf16> to vector<8x32xbf16>
    %c0_3 = arith.constant 0 : index
    %c0_4 = arith.constant 0 : index
    %5 = vector.load %arg5[%c0_3, %c0_4] : memref<32x32xbf16, #tpu.memory_space<vmem>>, vector<32x32xbf16>
    %cst = arith.constant dense<0.000000e+00> : vector<8x32xf32>
    %6 = tpu.matmul %4, %5, %cst {dimension_numbers = #tpu.dot_dimension_numbers<[1], [0], [0], [1], [0, 0, 1, 1], [], []>} : vector<8x32xbf16>, vector<32x32xbf16>, vector<8x32xf32> -> vector<8x32xf32>
    %c0_5 = arith.constant 0 : index
    %c0_6 = arith.constant 0 : index
    %7 = vector.load %arg6[%c0_5, %c0_6] : memref<1x32xf32, #tpu.memory_space<vmem>>, vector<1x32xf32>
    %8 = vector.broadcast %7 : vector<1x32xf32> to vector<8x32xf32>
    %9 = arith.addf %6, %8 : vector<8x32xf32>
    %10 = arith.truncf %9 : vector<8x32xf32> to vector<8x32xbf16>
    %11 = vector.extract_strided_slice %10 {offsets = [0, 0], sizes = [8, 8], strides = [1, 1]} : vector<8x32xbf16> to vector<8x8xbf16>
    %cst_7 = arith.constant 0xFF800000 : f32
    %12 = vector.broadcast %cst_7 : f32 to vector<8x1xf32>
    %cst_8 = arith.constant 0.000000e+00 : f32
    %13 = vector.broadcast %cst_8 : f32 to vector<8x1xf32>
    %cst_9 = arith.constant 0.000000e+00 : f32
    %14 = vector.broadcast %cst_9 : f32 to vector<8x8xf32>
    %c0_10 = arith.constant 0 : index
    %c0_11 = arith.constant 0 : index
    %15 = vector.load %arg14[%c0_10, %c0_11] : memref<8x32xbf16, #tpu.memory_space<vmem>>, vector<8x8xbf16>
    %c0_12 = arith.constant 0 : index
    %c0_13 = arith.constant 0 : index
    %16 = vector.load %arg15[%c0_12, %c0_13] : memref<8x32xbf16, #tpu.memory_space<vmem>>, vector<8x8xbf16>
    %cst_14 = arith.constant dense<0.000000e+00> : vector<8x8xf32>
    %17 = tpu.matmul %11, %15, %cst_14 {dimension_numbers = #tpu.dot_dimension_numbers<[1], [1], [0], [0], [0, 0, 1, 0], [], []>} : vector<8x8xbf16>, vector<8x8xbf16>, vector<8x8xf32> -> vector<8x8xf32>
    %c8_i32 = arith.constant 8 : i32
    %18 = arith.muli %arg1, %c8_i32 : i32
    %19 = tpu.iota {dimensions = array<i32: 0>} : vector<8x8xi32>
    %20 = vector.broadcast %18 : i32 to vector<8x8xi32>
    %21 = arith.addi %20, %19 : vector<8x8xi32>
    %22 = tpu.iota {dimensions = array<i32: 1>} : vector<8x8xi32>
    %c0_i32_15 = arith.constant 0 : i32
    %23 = vector.broadcast %c0_i32_15 : i32 to vector<8x8xi32>
    %24 = arith.addi %23, %22 : vector<8x8xi32>
    %25 = arith.cmpi sge, %21, %24 : vector<8x8xi32>
    %cst_16 = arith.constant -1.000000e+09 : f32
    %26 = vector.broadcast %cst_16 : f32 to vector<8x8xf32>
    %27 = arith.select %25, %17, %26 : vector<8x8xi1>, vector<8x8xf32>
    %cst_17 = arith.constant dense<0xFF800000> : vector<8xf32>
    %28 = vector.multi_reduction <maximumf>, %27, %cst_17 [1] : vector<8x8xf32> to vector<8xf32>
    %29 = vector.shape_cast %28 : vector<8xf32> to vector<8x1xf32>
    %30 = arith.maximumf %12, %29 : vector<8x1xf32>
    %31 = arith.subf %12, %30 : vector<8x1xf32>
    %32 = math.exp %31 : vector<8x1xf32>
    %33 = vector.broadcast %30 : vector<8x1xf32> to vector<8x8xf32>
    %34 = arith.subf %27, %33 : vector<8x8xf32>
    %35 = math.exp %34 : vector<8x8xf32>
    %36 = arith.mulf %32, %13 : vector<8x1xf32>
    %cst_18 = arith.constant dense<0.000000e+00> : vector<8xf32>
    %37 = vector.multi_reduction <add>, %35, %cst_18 [1] : vector<8x8xf32> to vector<8xf32>
    %38 = vector.shape_cast %37 : vector<8xf32> to vector<8x1xf32>
    %39 = arith.addf %36, %38 : vector<8x1xf32>
    %40 = vector.broadcast %32 : vector<8x1xf32> to vector<8x8xf32>
    %41 = arith.mulf %40, %14 : vector<8x8xf32>
    %42 = arith.truncf %35 : vector<8x8xf32> to vector<8x8xbf16>
    %cst_19 = arith.constant dense<0.000000e+00> : vector<8x8xf32>
    %43 = tpu.matmul %42, %16, %cst_19 {dimension_numbers = #tpu.dot_dimension_numbers<[1], [0], [0], [1], [0, 0, 1, 1], [], []>} : vector<8x8xbf16>, vector<8x8xbf16>, vector<8x8xf32> -> vector<8x8xf32>
    %44 = arith.addf %41, %43 : vector<8x8xf32>
    %45 = tpu.reciprocal %39 {approx = true} : vector<8x1xf32> -> vector<8x1xf32>
    %46 = vector.broadcast %45 : vector<8x1xf32> to vector<8x8xf32>
    %47 = arith.mulf %44, %46 : vector<8x8xf32>
    %48 = arith.truncf %47 : vector<8x8xf32> to vector<8x8xbf16>
    %c0_20 = arith.constant 0 : index
    %c0_21 = arith.constant 0 : index
    %49 = vector.load %arg16[%c0_20, %c0_21] : memref<8x32xbf16, #tpu.memory_space<vmem>>, vector<8x8xbf16>
    tpu.vector_store %arg16[%c0_20, %c0_21], %48 {strides = array<i32>} : memref<8x32xbf16, #tpu.memory_space<vmem>>, vector<8x8xbf16>,
    %50 = vector.extract_strided_slice %10 {offsets = [0, 8], sizes = [8, 8], strides = [1, 1]} : vector<8x32xbf16> to vector<8x8xbf16>
    %cst_22 = arith.constant 0xFF800000 : f32
    %51 = vector.broadcast %cst_22 : f32 to vector<8x1xf32>
    %cst_23 = arith.constant 0.000000e+00 : f32
    %52 = vector.broadcast %cst_23 : f32 to vector<8x1xf32>
    %cst_24 = arith.constant 0.000000e+00 : f32
    %53 = vector.broadcast %cst_24 : f32 to vector<8x8xf32>
    %c0_25 = arith.constant 0 : index
    %c8 = arith.constant 8 : index
    %54 = vector.load %arg14[%c0_25, %c8] : memref<8x32xbf16, #tpu.memory_space<vmem>>, vector<8x8xbf16>
    %c0_26 = arith.constant 0 : index
    %c8_27 = arith.constant 8 : index
    %55 = vector.load %arg15[%c0_26, %c8_27] : memref<8x32xbf16, #tpu.memory_space<vmem>>, vector<8x8xbf16>
    %cst_28 = arith.constant dense<0.000000e+00> : vector<8x8xf32>
    %56 = tpu.matmul %50, %54, %cst_28 {dimension_numbers = #tpu.dot_dimension_numbers<[1], [1], [0], [0], [0, 0, 1, 0], [], []>} : vector<8x8xbf16>, vector<8x8xbf16>, vector<8x8xf32> -> vector<8x8xf32>
    %c8_i32_29 = arith.constant 8 : i32
    %57 = arith.muli %arg1, %c8_i32_29 : i32
    %58 = tpu.iota {dimensions = array<i32: 0>} : vector<8x8xi32>
    %59 = vector.broadcast %57 : i32 to vector<8x8xi32>
    %60 = arith.addi %59, %58 : vector<8x8xi32>
    %61 = tpu.iota {dimensions = array<i32: 1>} : vector<8x8xi32>
    %c0_i32_30 = arith.constant 0 : i32
    %62 = vector.broadcast %c0_i32_30 : i32 to vector<8x8xi32>
    %63 = arith.addi %62, %61 : vector<8x8xi32>
    %64 = arith.cmpi sge, %60, %63 : vector<8x8xi32>
    %cst_31 = arith.constant -1.000000e+09 : f32
    %65 = vector.broadcast %cst_31 : f32 to vector<8x8xf32>
    %66 = arith.select %64, %56, %65 : vector<8x8xi1>, vector<8x8xf32>
    %cst_32 = arith.constant dense<0xFF800000> : vector<8xf32>
    %67 = vector.multi_reduction <maximumf>, %66, %cst_32 [1] : vector<8x8xf32> to vector<8xf32>
    %68 = vector.shape_cast %67 : vector<8xf32> to vector<8x1xf32>
    %69 = arith.maximumf %51, %68 : vector<8x1xf32>
    %70 = arith.subf %51, %69 : vector<8x1xf32>
    %71 = math.exp %70 : vector<8x1xf32>
    %72 = vector.broadcast %69 : vector<8x1xf32> to vector<8x8xf32>
    %73 = arith.subf %66, %72 : vector<8x8xf32>
    %74 = math.exp %73 : vector<8x8xf32>
    %75 = arith.mulf %71, %52 : vector<8x1xf32>
    %cst_33 = arith.constant dense<0.000000e+00> : vector<8xf32>
    %76 = vector.multi_reduction <add>, %74, %cst_33 [1] : vector<8x8xf32> to vector<8xf32>
    %77 = vector.shape_cast %76 : vector<8xf32> to vector<8x1xf32>
    %78 = arith.addf %75, %77 : vector<8x1xf32>
    %79 = vector.broadcast %71 : vector<8x1xf32> to vector<8x8xf32>
    %80 = arith.mulf %79, %53 : vector<8x8xf32>
    %81 = arith.truncf %74 : vector<8x8xf32> to vector<8x8xbf16>
    %cst_34 = arith.constant dense<0.000000e+00> : vector<8x8xf32>
    %82 = tpu.matmul %81, %55, %cst_34 {dimension_numbers = #tpu.dot_dimension_numbers<[1], [0], [0], [1], [0, 0, 1, 1], [], []>} : vector<8x8xbf16>, vector<8x8xbf16>, vector<8x8xf32> -> vector<8x8xf32>
    %83 = arith.addf %80, %82 : vector<8x8xf32>
    %84 = tpu.reciprocal %78 {approx = true} : vector<8x1xf32> -> vector<8x1xf32>
    %85 = vector.broadcast %84 : vector<8x1xf32> to vector<8x8xf32>
    %86 = arith.mulf %83, %85 : vector<8x8xf32>
    %87 = arith.truncf %86 : vector<8x8xf32> to vector<8x8xbf16>
    %c0_35 = arith.constant 0 : index
    %c8_36 = arith.constant 8 : index
    %88 = vector.load %arg16[%c0_35, %c8_36] : memref<8x32xbf16, #tpu.memory_space<vmem>>, vector<8x8xbf16>
    tpu.vector_store %arg16[%c0_35, %c8_36], %87 {strides = array<i32>} : memref<8x32xbf16, #tpu.memory_space<vmem>>, vector<8x8xbf16>,
    %89 = vector.extract_strided_slice %10 {offsets = [0, 16], sizes = [8, 8], strides = [1, 1]} : vector<8x32xbf16> to vector<8x8xbf16>
    %cst_37 = arith.constant 0xFF800000 : f32
    %90 = vector.broadcast %cst_37 : f32 to vector<8x1xf32>
    %cst_38 = arith.constant 0.000000e+00 : f32
    %91 = vector.broadcast %cst_38 : f32 to vector<8x1xf32>
    %cst_39 = arith.constant 0.000000e+00 : f32
    %92 = vector.broadcast %cst_39 : f32 to vector<8x8xf32>
    %c0_40 = arith.constant 0 : index
    %c16 = arith.constant 16 : index
    %93 = vector.load %arg14[%c0_40, %c16] : memref<8x32xbf16, #tpu.memory_space<vmem>>, vector<8x8xbf16>
    %c0_41 = arith.constant 0 : index
    %c16_42 = arith.constant 16 : index
    %94 = vector.load %arg15[%c0_41, %c16_42] : memref<8x32xbf16, #tpu.memory_space<vmem>>, vector<8x8xbf16>
    %cst_43 = arith.constant dense<0.000000e+00> : vector<8x8xf32>
    %95 = tpu.matmul %89, %93, %cst_43 {dimension_numbers = #tpu.dot_dimension_numbers<[1], [1], [0], [0], [0, 0, 1, 0], [], []>} : vector<8x8xbf16>, vector<8x8xbf16>, vector<8x8xf32> -> vector<8x8xf32>
    %c8_i32_44 = arith.constant 8 : i32
    %96 = arith.muli %arg1, %c8_i32_44 : i32
    %97 = tpu.iota {dimensions = array<i32: 0>} : vector<8x8xi32>
    %98 = vector.broadcast %96 : i32 to vector<8x8xi32>
    %99 = arith.addi %98, %97 : vector<8x8xi32>
    %100 = tpu.iota {dimensions = array<i32: 1>} : vector<8x8xi32>
    %c0_i32_45 = arith.constant 0 : i32
    %101 = vector.broadcast %c0_i32_45 : i32 to vector<8x8xi32>
    %102 = arith.addi %101, %100 : vector<8x8xi32>
    %103 = arith.cmpi sge, %99, %102 : vector<8x8xi32>
    %cst_46 = arith.constant -1.000000e+09 : f32
    %104 = vector.broadcast %cst_46 : f32 to vector<8x8xf32>
    %105 = arith.select %103, %95, %104 : vector<8x8xi1>, vector<8x8xf32>
    %cst_47 = arith.constant dense<0xFF800000> : vector<8xf32>
    %106 = vector.multi_reduction <maximumf>, %105, %cst_47 [1] : vector<8x8xf32> to vector<8xf32>
    %107 = vector.shape_cast %106 : vector<8xf32> to vector<8x1xf32>
    %108 = arith.maximumf %90, %107 : vector<8x1xf32>
    %109 = arith.subf %90, %108 : vector<8x1xf32>
    %110 = math.exp %109 : vector<8x1xf32>
    %111 = vector.broadcast %108 : vector<8x1xf32> to vector<8x8xf32>
    %112 = arith.subf %105, %111 : vector<8x8xf32>
    %113 = math.exp %112 : vector<8x8xf32>
    %114 = arith.mulf %110, %91 : vector<8x1xf32>
    %cst_48 = arith.constant dense<0.000000e+00> : vector<8xf32>
    %115 = vector.multi_reduction <add>, %113, %cst_48 [1] : vector<8x8xf32> to vector<8xf32>
    %116 = vector.shape_cast %115 : vector<8xf32> to vector<8x1xf32>
    %117 = arith.addf %114, %116 : vector<8x1xf32>
    %118 = vector.broadcast %110 : vector<8x1xf32> to vector<8x8xf32>
    %119 = arith.mulf %118, %92 : vector<8x8xf32>
    %120 = arith.truncf %113 : vector<8x8xf32> to vector<8x8xbf16>
    %cst_49 = arith.constant dense<0.000000e+00> : vector<8x8xf32>
    %121 = tpu.matmul %120, %94, %cst_49 {dimension_numbers = #tpu.dot_dimension_numbers<[1], [0], [0], [1], [0, 0, 1, 1], [], []>} : vector<8x8xbf16>, vector<8x8xbf16>, vector<8x8xf32> -> vector<8x8xf32>
    %122 = arith.addf %119, %121 : vector<8x8xf32>
    %123 = tpu.reciprocal %117 {approx = true} : vector<8x1xf32> -> vector<8x1xf32>
    %124 = vector.broadcast %123 : vector<8x1xf32> to vector<8x8xf32>
    %125 = arith.mulf %122, %124 : vector<8x8xf32>
    %126 = arith.truncf %125 : vector<8x8xf32> to vector<8x8xbf16>
    %c0_50 = arith.constant 0 : index
    %c16_51 = arith.constant 16 : index
    %127 = vector.load %arg16[%c0_50, %c16_51] : memref<8x32xbf16, #tpu.memory_space<vmem>>, vector<8x8xbf16>
    tpu.vector_store %arg16[%c0_50, %c16_51], %126 {strides = array<i32>} : memref<8x32xbf16, #tpu.memory_space<vmem>>, vector<8x8xbf16>,
    %128 = vector.extract_strided_slice %10 {offsets = [0, 24], sizes = [8, 8], strides = [1, 1]} : vector<8x32xbf16> to vector<8x8xbf16>
    %cst_52 = arith.constant 0xFF800000 : f32
    %129 = vector.broadcast %cst_52 : f32 to vector<8x1xf32>
    %cst_53 = arith.constant 0.000000e+00 : f32
    %130 = vector.broadcast %cst_53 : f32 to vector<8x1xf32>
    %cst_54 = arith.constant 0.000000e+00 : f32
    %131 = vector.broadcast %cst_54 : f32 to vector<8x8xf32>
    %c0_55 = arith.constant 0 : index
    %c24 = arith.constant 24 : index
    %132 = vector.load %arg14[%c0_55, %c24] : memref<8x32xbf16, #tpu.memory_space<vmem>>, vector<8x8xbf16>
    %c0_56 = arith.constant 0 : index
    %c24_57 = arith.constant 24 : index
    %133 = vector.load %arg15[%c0_56, %c24_57] : memref<8x32xbf16, #tpu.memory_space<vmem>>, vector<8x8xbf16>
    %cst_58 = arith.constant dense<0.000000e+00> : vector<8x8xf32>
    %134 = tpu.matmul %128, %132, %cst_58 {dimension_numbers = #tpu.dot_dimension_numbers<[1], [1], [0], [0], [0, 0, 1, 0], [], []>} : vector<8x8xbf16>, vector<8x8xbf16>, vector<8x8xf32> -> vector<8x8xf32>
    %c8_i32_59 = arith.constant 8 : i32
    %135 = arith.muli %arg1, %c8_i32_59 : i32
    %136 = tpu.iota {dimensions = array<i32: 0>} : vector<8x8xi32>
    %137 = vector.broadcast %135 : i32 to vector<8x8xi32>
    %138 = arith.addi %137, %136 : vector<8x8xi32>
    %139 = tpu.iota {dimensions = array<i32: 1>} : vector<8x8xi32>
    %c0_i32_60 = arith.constant 0 : i32
    %140 = vector.broadcast %c0_i32_60 : i32 to vector<8x8xi32>
    %141 = arith.addi %140, %139 : vector<8x8xi32>
    %142 = arith.cmpi sge, %138, %141 : vector<8x8xi32>
    %cst_61 = arith.constant -1.000000e+09 : f32
    %143 = vector.broadcast %cst_61 : f32 to vector<8x8xf32>
    %144 = arith.select %142, %134, %143 : vector<8x8xi1>, vector<8x8xf32>
    %cst_62 = arith.constant dense<0xFF800000> : vector<8xf32>
    %145 = vector.multi_reduction <maximumf>, %144, %cst_62 [1] : vector<8x8xf32> to vector<8xf32>
    %146 = vector.shape_cast %145 : vector<8xf32> to vector<8x1xf32>
    %147 = arith.maximumf %129, %146 : vector<8x1xf32>
    %148 = arith.subf %129, %147 : vector<8x1xf32>
    %149 = math.exp %148 : vector<8x1xf32>
    %150 = vector.broadcast %147 : vector<8x1xf32> to vector<8x8xf32>
    %151 = arith.subf %144, %150 : vector<8x8xf32>
    %152 = math.exp %151 : vector<8x8xf32>
    %153 = arith.mulf %149, %130 : vector<8x1xf32>
    %cst_63 = arith.constant dense<0.000000e+00> : vector<8xf32>
    %154 = vector.multi_reduction <add>, %152, %cst_63 [1] : vector<8x8xf32> to vector<8xf32>
    %155 = vector.shape_cast %154 : vector<8xf32> to vector<8x1xf32>
    %156 = arith.addf %153, %155 : vector<8x1xf32>
    %157 = vector.broadcast %149 : vector<8x1xf32> to vector<8x8xf32>
    %158 = arith.mulf %157, %131 : vector<8x8xf32>
    %159 = arith.truncf %152 : vector<8x8xf32> to vector<8x8xbf16>
    %cst_64 = arith.constant dense<0.000000e+00> : vector<8x8xf32>
    %160 = tpu.matmul %159, %133, %cst_64 {dimension_numbers = #tpu.dot_dimension_numbers<[1], [0], [0], [1], [0, 0, 1, 1], [], []>} : vector<8x8xbf16>, vector<8x8xbf16>, vector<8x8xf32> -> vector<8x8xf32>
    %161 = arith.addf %158, %160 : vector<8x8xf32>
    %162 = tpu.reciprocal %156 {approx = true} : vector<8x1xf32> -> vector<8x1xf32>
    %163 = vector.broadcast %162 : vector<8x1xf32> to vector<8x8xf32>
    %164 = arith.mulf %161, %163 : vector<8x8xf32>
    %165 = arith.truncf %164 : vector<8x8xf32> to vector<8x8xbf16>
    %c0_65 = arith.constant 0 : index
    %c24_66 = arith.constant 24 : index
    %166 = vector.load %arg16[%c0_65, %c24_66] : memref<8x32xbf16, #tpu.memory_space<vmem>>, vector<8x8xbf16>
    tpu.vector_store %arg16[%c0_65, %c24_66], %165 {strides = array<i32>} : memref<8x32xbf16, #tpu.memory_space<vmem>>, vector<8x8xbf16>,
    %c0_67 = arith.constant 0 : index
    %c0_68 = arith.constant 0 : index
    %167 = vector.load %arg16[%c0_67, %c0_68] : memref<8x32xbf16, #tpu.memory_space<vmem>>, vector<8x32xbf16>
    %c0_69 = arith.constant 0 : index
    %c0_70 = arith.constant 0 : index
    %168 = vector.load %arg11[%c0_69, %c0_70] : memref<32x32xbf16, #tpu.memory_space<vmem>>, vector<32x32xbf16>
    %cst_71 = arith.constant dense<0.000000e+00> : vector<8x32xf32>
    %169 = tpu.matmul %167, %168, %cst_71 {dimension_numbers = #tpu.dot_dimension_numbers<[1], [0], [0], [1], [0, 0, 1, 1], [], []>} : vector<8x32xbf16>, vector<32x32xbf16>, vector<8x32xf32> -> vector<8x32xf32>
    %c0_72 = arith.constant 0 : index
    %c0_73 = arith.constant 0 : index
    %170 = vector.load %arg12[%c0_72, %c0_73] : memref<1x32xf32, #tpu.memory_space<vmem>>, vector<1x32xf32>
    %171 = vector.broadcast %170 : vector<1x32xf32> to vector<8x32xf32>
    %172 = arith.addf %169, %171 : vector<8x32xf32>
    %c0_74 = arith.constant 0 : index
    %c0_75 = arith.constant 0 : index
    %c0_76 = arith.constant 0 : index
    %173 = vector.load %arg13[%c0_74, %c0_75, %c0_76] : memref<1x8x32xf32, #tpu.memory_space<vmem>>, vector<1x8x32xf32>
    %174 = vector.shape_cast %173 : vector<1x8x32xf32> to vector<8x32xf32>
    %175 = vector.shape_cast %172 : vector<8x32xf32> to vector<1x8x32xf32>
    tpu.vector_store %arg13[%c0_74, %c0_75, %c0_76], %175 {strides = array<i32>} : memref<1x8x32xf32, #tpu.memory_space<vmem>>, vector<1x8x32xf32>,
    return
  }
  func.func @transform_0(%arg0: i32, %arg1: i32) -> (i32, i32, i32) {
    %c0_i32 = arith.constant 0 : i32
    %c0_i32_0 = arith.constant 0 : i32
    return %arg0, %arg1, %c0_i32 : i32, i32, i32
  }
  func.func @transform_1(%arg0: i32, %arg1: i32) -> (i32, i32, i32) {
    %c0_i32 = arith.constant 0 : i32
    %c0_i32_0 = arith.constant 0 : i32
    %c0_i32_1 = arith.constant 0 : i32
    return %arg0, %c0_i32, %c0_i32_0 : i32, i32, i32
  }
  func.func @transform_2(%arg0: i32, %arg1: i32) -> (i32, i32, i32) {
    %c0_i32 = arith.constant 0 : i32
    %c0_i32_0 = arith.constant 0 : i32
    %c0_i32_1 = arith.constant 0 : i32
    return %arg0, %c0_i32, %c0_i32_0 : i32, i32, i32
  }
  func.func @transform_3(%arg0: i32, %arg1: i32) -> (i32, i32) {
    %c0_i32 = arith.constant 0 : i32
    %c0_i32_0 = arith.constant 0 : i32
    %c0_i32_1 = arith.constant 0 : i32
    return %c0_i32, %c0_i32_0 : i32, i32
  }
  func.func @transform_4(%arg0: i32, %arg1: i32) -> (i32, i32) {
    %c0_i32 = arith.constant 0 : i32
    %c0_i32_0 = arith.constant 0 : i32
    %c0_i32_1 = arith.constant 0 : i32
    return %c0_i32, %c0_i32_0 : i32, i32
  }
  func.func @transform_5(%arg0: i32, %arg1: i32) -> (i32, i32) {
    %c0_i32 = arith.constant 0 : i32
    %c0_i32_0 = arith.constant 0 : i32
    %c0_i32_1 = arith.constant 0 : i32
    return %c0_i32, %c0_i32_0 : i32, i32
  }
  func.func @transform_6(%arg0: i32, %arg1: i32) -> (i32, i32) {
    %c0_i32 = arith.constant 0 : i32
    %c0_i32_0 = arith.constant 0 : i32
    %c0_i32_1 = arith.constant 0 : i32
    return %c0_i32, %c0_i32_0 : i32, i32
  }
  func.func @transform_7(%arg0: i32, %arg1: i32) -> (i32, i32) {
    %c0_i32 = arith.constant 0 : i32
    %c0_i32_0 = arith.constant 0 : i32
    %c0_i32_1 = arith.constant 0 : i32
    return %c0_i32, %c0_i32_0 : i32, i32
  }
  func.func @transform_8(%arg0: i32, %arg1: i32) -> (i32, i32) {
    %c0_i32 = arith.constant 0 : i32
    %c0_i32_0 = arith.constant 0 : i32
    %c0_i32_1 = arith.constant 0 : i32
    return %c0_i32, %c0_i32_0 : i32, i32
  }
  func.func @transform_9(%arg0: i32, %arg1: i32) -> (i32, i32) {
    %c0_i32 = arith.constant 0 : i32
    %c0_i32_0 = arith.constant 0 : i32
    %c0_i32_1 = arith.constant 0 : i32
    return %c0_i32, %c0_i32_0 : i32, i32
  }
  func.func @transform_10(%arg0: i32, %arg1: i32) -> (i32, i32) {
    %c0_i32 = arith.constant 0 : i32
    %c0_i32_0 = arith.constant 0 : i32
    %c0_i32_1 = arith.constant 0 : i32
    return %c0_i32, %c0_i32_0 : i32, i32
  }
  func.func @transform_11(%arg0: i32, %arg1: i32) -> (i32, i32, i32) {
    %c0_i32 = arith.constant 0 : i32
    %c0_i32_0 = arith.constant 0 : i32
    return %arg0, %arg1, %c0_i32 : i32, i32, i32
  }
}

</mosaic_0001>

<llo_original>
// kernel: tpu_custom_call.1
$region0: #{tpu_custom_call.1}
  #allocation0 [shape = 'u32[]', space=smem, size = 0x4, offset = 0x4, fixed_abs, tag = 'smem constant byte address 0x4 - core index']
  #allocation1 [shape = 'u32[144,128]{1,0:T(1,128)}', space=vmem, size = 0x12000, scoped, tag = 'internal scratch']
  #allocation2 [shape = 'bf16[8,32]{1,0:T(8,128)(2,1)}', space=vmem, size = 0x800, scoped, tag = 'scratch operand']
  #allocation3 [shape = 'bf16[8,32]{1,0:T(8,128)(2,1)}', space=vmem, size = 0x800, scoped, tag = 'scratch operand']
  #allocation4 [shape = 'bf16[8,32]{1,0:T(8,128)(2,1)}', space=vmem, size = 0x800, scoped, tag = 'scratch operand']
  %s0 = inlined_call_operand.hbm [shape: bf16[2,8,32], index: 0, kind: input, shape index: {}]
  %s1 = inlined_call_operand.hbm [shape: bf16[2,8,32], index: 1, kind: input, shape index: {}]
  %s2 = inlined_call_operand.hbm [shape: bf16[2,8,32], index: 2, kind: input, shape index: {}]
  %s3 = inlined_call_operand.hbm [shape: bf16[32,32], index: 3, kind: input, shape index: {}]
  %s4 = inlined_call_operand.hbm [shape: f32[1,32], index: 4, kind: input, shape index: {}]
  %s5 = inlined_call_operand.hbm [shape: bf16[32,32], index: 5, kind: input, shape index: {}]
  %s6 = inlined_call_operand.hbm [shape: f32[1,32], index: 6, kind: input, shape index: {}]
  %s7 = inlined_call_operand.hbm [shape: bf16[32,32], index: 7, kind: input, shape index: {}]
  %s8 = inlined_call_operand.hbm [shape: f32[1,32], index: 8, kind: input, shape index: {}]
  %s9 = inlined_call_operand.hbm [shape: bf16[32,32], index: 9, kind: input, shape index: {}]
  %s10 = inlined_call_operand.hbm [shape: f32[1,32], index: 10, kind: input, shape index: {}]
  %s11 = inlined_call_operand.hbm [shape: f32[2,8,32], index: 11, kind: output, shape index: {}]
  %s12 = sld [smem:[#allocation0]]
  $region125: #{tpu_custom_call.1} parent=0
    _
  %s14 = ssub.s32 1, %s12
  %s15 = scalar_select 0, %s14, %s12
  $region1: #{tpu_custom_call.1} parent=0
    #allocation5 [shape = 'u8[4096]{0}', space=vmem, size = 0x1000, scoped, tag = 'input window, operand 0']
    #allocation6 [shape = 's32[2]{0}', space=sflag, size = 0x8, scoped, tag = 'scoped memory for tpu_custom_call.1']
    #allocation7 [shape = 's32[2]{0}', space=sflag, size = 0x8, scoped, tag = 'scoped memory for tpu_custom_call.1']
    #allocation8 [shape = 'u8[4096]{0}', space=vmem, size = 0x1000, scoped, tag = 'input window, operand 1']
    #allocation9 [shape = 's32[2]{0}', space=sflag, size = 0x8, scoped, tag = 'scoped memory for tpu_custom_call.1']
    #allocation10 [shape = 'u8[4096]{0}', space=vmem, size = 0x1000, scoped, tag = 'input window, operand 2']
    #allocation11 [shape = 'u8[8192]{0}', space=vmem, size = 0x2000, scoped, tag = 'input window, operand 3, single buffered']
    #allocation12 [shape = 's32[1]{0}', space=sflag, size = 0x4, scoped, tag = 'scoped memory for tpu_custom_call.1']
    #allocation13 [shape = 'u8[512]{0}', space=vmem, size = 0x400, scoped, tag = 'input window, operand 4, single buffered']
    #allocation14 [shape = 'u8[8192]{0}', space=vmem, size = 0x2000, scoped, tag = 'input window, operand 5, single buffered']
    #allocation15 [shape = 's32[1]{0}', space=sflag, size = 0x4, scoped, tag = 'scoped memory for tpu_custom_call.1']
    #allocation16 [shape = 'u8[512]{0}', space=vmem, size = 0x400, scoped, tag = 'input window, operand 6, single buffered']
    #allocation17 [shape = 'u8[8192]{0}', space=vmem, size = 0x2000, scoped, tag = 'input window, operand 7, single buffered']
    #allocation18 [shape = 's32[1]{0}', space=sflag, size = 0x4, scoped, tag = 'scoped memory for tpu_custom_call.1']
    #allocation19 [shape = 'u8[512]{0}', space=vmem, size = 0x400, scoped, tag = 'input window, operand 8, single buffered']
    #allocation20 [shape = 'u8[8192]{0}', space=vmem, size = 0x2000, scoped, tag = 'input window, operand 9, single buffered']
    #allocation21 [shape = 's32[1]{0}', space=sflag, size = 0x4, scoped, tag = 'scoped memory for tpu_custom_call.1']
    #allocation22 [shape = 'u8[512]{0}', space=vmem, size = 0x400, scoped, tag = 'input window, operand 10, single buffered']
    #allocation23 [shape = 'u8[8192]{0}', space=vmem, size = 0x2000, scoped, tag = 'output window, operand 0']
    %16 = vsyncpa [#allocation6], 0
    %s17 = scalar_lea.sflag [#allocation6], 1
    %18 = vsyncpa %s17, 0
    %19 = vsyncpa [#allocation9], 0
    %s20 = scalar_lea.sflag [#allocation9], 1
    %21 = vsyncpa %s20, 0
    %22 = vsyncpa [#allocation12], 0
    %23 = vsyncpa [#allocation15], 0
    %24 = vsyncpa [#allocation18], 0
    %25 = vsyncpa [#allocation21], 0
    %26 = vsyncpa [#allocation7], 0
    %s27 = scalar_lea.sflag [#allocation7], 1
    %28 = vsyncpa %s27, 0
    loop: start=0, step=1, limit=4
    $region2: #{tpu_custom_call.1} parent=1 // loop_pre_header
      _
    $region3: #{tpu_custom_call.1} parent=1 // loop_header
      %s30 = sphi 0, %s34
      %p31 = scmp.ge.s32.totalorder %s30, 4
      %s37 = sphi 0, %s49
      %s38 = sphi 0, %s45
      %s39 = sphi 0, %s37
      %s40 = sphi 0, %s38
      %s41 = sphi 0, %s39
      %s42 = sphi 0, %s40
      %s54 = sphi 0, %s56
      %s57 = sphi 0, %s54
      %s58 = sphi 0, %s57
      %s74 = sphi 0, %s58
      %s80 = sphi 0, %s82
      %s83 = sphi 0, %s80
      %s84 = sphi 0, %s83
      %s100 = sphi 0, %s84
      %s106 = sphi 0, %s108
      %s109 = sphi 0, %s106
      %s110 = sphi 0, %s109
      %s126 = sphi 0, %s110
      %s130 = sphi 0, %s130
      %s132 = sphi 0, %s130
      %s133 = sphi 0, %s132
      %s147 = sphi 0, %s133
      %s151 = sphi 0, %s151
      %s153 = sphi 0, %s151
      %s154 = sphi 0, %s153
      %s168 = sphi 0, %s154
      %s172 = sphi 0, %s172
      %s174 = sphi 0, %s172
      %s175 = sphi 0, %s174
      %s189 = sphi 0, %s175
      %s193 = sphi 0, %s193
      %s195 = sphi 0, %s193
      %s196 = sphi 0, %s195
      %s210 = sphi 0, %s196
      %s214 = sphi 0, %s214
      %s216 = sphi 0, %s214
      %s217 = sphi 0, %s216
      %s231 = sphi 0, %s217
      %s235 = sphi 0, %s235
      %s237 = sphi 0, %s235
      %s238 = sphi 0, %s237
      %s252 = sphi 0, %s238
      %s256 = sphi 0, %s256
      %s258 = sphi 0, %s256
      %s259 = sphi 0, %s258
      %s273 = sphi 0, %s259
      %s277 = sphi 0, %s277
      %s279 = sphi 0, %s277
      %s280 = sphi 0, %s279
      %s294 = sphi 0, %s280
      %s302 = sphi 0, %s304
      %s305 = sphi 0, %s302
      %s306 = sphi 0, %s305
      %s322 = sphi 0, %s306
    $region4: #{tpu_custom_call.1} parent=1 // loop_header_branch
      %33 = sbr.rel (%p31) target = $region8
    $region5: #{tpu_custom_call.1} parent=1 // loop_body
      %s35 = ssub.s32 %s30, 1
      %s36 = ssub.s32 %s30, 2
      %s43 = sadd.s32 1, %s38
      %p44 = scmp.ge.s32.totalorder %s43, 1
      %s45 = scalar_select %p44, 0, %s43
      %s46 = sadd.s32 1, %s37
      %s47 = scalar_select %p44, %s46, %s37
      %p48 = scmp.ge.s32.totalorder %s47, 2
      %s49 = scalar_select %p48, 0, %s47
      %s50 = ssub.s32 %s37, %s49
      %s51 = ssub.s32 %s38, %s45
      %s52 = sor.u32 %s50, %s51
      %p53 = scmp.eq.s32.totalorder %s52, 0
      %s55 = sadd.s32 %s54, 1
      %s56 = scalar_select %p53, %s54, %s55
      %p59 = pneg %p53
      %p60 = scmp.eq.s32.totalorder %s30, 1
      %p61 = por %p59, %p60
      %p62 = scmp.ne.s32.totalorder %s54, %s57
      %p63 = scmp.eq.s32.totalorder %s30, 0
      %p64 = por %p62, %p63
      %p65 = scmp.ne.s32.totalorder %s54, %s57
      %p66 = scmp.eq.s32.totalorder %s35, 1
      %p67 = por %p65, %p66
      %p68 = scmp.ne.s32.totalorder %s57, %s58
      %p69 = scmp.eq.s32.totalorder %s35, 0
      %p70 = por %p68, %p69
      %p71 = scmp.ne.s32.totalorder %s57, %s58
      %p72 = scmp.eq.s32.totalorder %s36, 1
      %p73 = por %p71, %p72
      %p75 = scmp.ne.s32.totalorder %s58, %s74
      %p76 = scmp.eq.s32.totalorder %s36, 0
      %p77 = por %p75, %p76
      %s78 = ssub.s32 %s37, %s49
      %p79 = scmp.eq.s32.totalorder %s78, 0
      %s81 = sadd.s32 %s80, 1
      %s82 = scalar_select %p79, %s80, %s81
      %p85 = pneg %p79
      %p86 = scmp.eq.s32.totalorder %s30, 1
      %p87 = por %p85, %p86
      %p88 = scmp.ne.s32.totalorder %s80, %s83
      %p89 = scmp.eq.s32.totalorder %s30, 0
      %p90 = por %p88, %p89
      %p91 = scmp.ne.s32.totalorder %s80, %s83
      %p92 = scmp.eq.s32.totalorder %s35, 1
      %p93 = por %p91, %p92
      %p94 = scmp.ne.s32.totalorder %s83, %s84
      %p95 = scmp.eq.s32.totalorder %s35, 0
      %p96 = por %p94, %p95
      %p97 = scmp.ne.s32.totalorder %s83, %s84
      %p98 = scmp.eq.s32.totalorder %s36, 1
      %p99 = por %p97, %p98
      %p101 = scmp.ne.s32.totalorder %s84, %s100
      %p102 = scmp.eq.s32.totalorder %s36, 0
      %p103 = por %p101, %p102
      %s104 = ssub.s32 %s37, %s49
      %p105 = scmp.eq.s32.totalorder %s104, 0
      %s107 = sadd.s32 %s106, 1
      %s108 = scalar_select %p105, %s106, %s107
      %p111 = pneg %p105
      %p112 = scmp.eq.s32.totalorder %s30, 1
      %p113 = por %p111, %p112
      %p114 = scmp.ne.s32.totalorder %s106, %s109
      %p115 = scmp.eq.s32.totalorder %s30, 0
      %p116 = por %p114, %p115
      %p117 = scmp.ne.s32.totalorder %s106, %s109
      %p118 = scmp.eq.s32.totalorder %s35, 1
      %p119 = por %p117, %p118
      %p120 = scmp.ne.s32.totalorder %s109, %s110
      %p121 = scmp.eq.s32.totalorder %s35, 0
      %p122 = por %p120, %p121
      %p123 = scmp.ne.s32.totalorder %s109, %s110
      %p124 = scmp.eq.s32.totalorder %s36, 1
      %p125 = por %p123, %p124
      %p127 = scmp.ne.s32.totalorder %s110, %s126
      %p128 = scmp.eq.s32.totalorder %s36, 0
      %p129 = por %p127, %p128
      %s131 = sadd.s32 %s130, 1
      %p134 = scmp.eq.s32.totalorder %s30, 1
      %p135 = scmp.ne.s32.totalorder %s130, %s132
      %p136 = scmp.eq.s32.totalorder %s30, 0
      %p137 = por %p135, %p136
      %p138 = scmp.ne.s32.totalorder %s130, %s132
      %p139 = scmp.eq.s32.totalorder %s35, 1
      %p140 = por %p138, %p139
      %p141 = scmp.ne.s32.totalorder %s132, %s133
      %p142 = scmp.eq.s32.totalorder %s35, 0
      %p143 = por %p141, %p142
      %p144 = scmp.ne.s32.totalorder %s132, %s133
      %p145 = scmp.eq.s32.totalorder %s36, 1
      %p146 = por %p144, %p145
      %p148 = scmp.ne.s32.totalorder %s133, %s147
      %p149 = scmp.eq.s32.totalorder %s36, 0
      %p150 = por %p148, %p149
      %s152 = sadd.s32 %s151, 1
      %p155 = scmp.eq.s32.totalorder %s30, 1
      %p156 = scmp.ne.s32.totalorder %s151, %s153
      %p157 = scmp.eq.s32.totalorder %s30, 0
      %p158 = por %p156, %p157
      %p159 = scmp.ne.s32.totalorder %s151, %s153
      %p160 = scmp.eq.s32.totalorder %s35, 1
      %p161 = por %p159, %p160
      %p162 = scmp.ne.s32.totalorder %s153, %s154
      %p163 = scmp.eq.s32.totalorder %s35, 0
      %p164 = por %p162, %p163
      %p165 = scmp.ne.s32.totalorder %s153, %s154
      %p166 = scmp.eq.s32.totalorder %s36, 1
      %p167 = por %p165, %p166
      %p169 = scmp.ne.s32.totalorder %s154, %s168
      %p170 = scmp.eq.s32.totalorder %s36, 0
      %p171 = por %p169, %p170
      %s173 = sadd.s32 %s172, 1
      %p176 = scmp.eq.s32.totalorder %s30, 1
      %p177 = scmp.ne.s32.totalorder %s172, %s174
      %p178 = scmp.eq.s32.totalorder %s30, 0
      %p179 = por %p177, %p178
      %p180 = scmp.ne.s32.totalorder %s172, %s174
      %p181 = scmp.eq.s32.totalorder %s35, 1
      %p182 = por %p180, %p181
      %p183 = scmp.ne.s32.totalorder %s174, %s175
      %p184 = scmp.eq.s32.totalorder %s35, 0
      %p185 = por %p183, %p184
      %p186 = scmp.ne.s32.totalorder %s174, %s175
      %p187 = scmp.eq.s32.totalorder %s36, 1
      %p188 = por %p186, %p187
      %p190 = scmp.ne.s32.totalorder %s175, %s189
      %p191 = scmp.eq.s32.totalorder %s36, 0
      %p192 = por %p190, %p191
      %s194 = sadd.s32 %s193, 1
      %p197 = scmp.eq.s32.totalorder %s30, 1
      %p198 = scmp.ne.s32.totalorder %s193, %s195
      %p199 = scmp.eq.s32.totalorder %s30, 0
      %p200 = por %p198, %p199
      %p201 = scmp.ne.s32.totalorder %s193, %s195
      %p202 = scmp.eq.s32.totalorder %s35, 1
      %p203 = por %p201, %p202
      %p204 = scmp.ne.s32.totalorder %s195, %s196
      %p205 = scmp.eq.s32.totalorder %s35, 0
      %p206 = por %p204, %p205
      %p207 = scmp.ne.s32.totalorder %s195, %s196
      %p208 = scmp.eq.s32.totalorder %s36, 1
      %p209 = por %p207, %p208
      %p211 = scmp.ne.s32.totalorder %s196, %s210
      %p212 = scmp.eq.s32.totalorder %s36, 0
      %p213 = por %p211, %p212
      %s215 = sadd.s32 %s214, 1
      %p218 = scmp.eq.s32.totalorder %s30, 1
      %p219 = scmp.ne.s32.totalorder %s214, %s216
      %p220 = scmp.eq.s32.totalorder %s30, 0
      %p221 = por %p219, %p220
      %p222 = scmp.ne.s32.totalorder %s214, %s216
      %p223 = scmp.eq.s32.totalorder %s35, 1
      %p224 = por %p222, %p223
      %p225 = scmp.ne.s32.totalorder %s216, %s217
      %p226 = scmp.eq.s32.totalorder %s35, 0
      %p227 = por %p225, %p226
      %p228 = scmp.ne.s32.totalorder %s216, %s217
      %p229 = scmp.eq.s32.totalorder %s36, 1
      %p230 = por %p228, %p229
      %p232 = scmp.ne.s32.totalorder %s217, %s231
      %p233 = scmp.eq.s32.totalorder %s36, 0
      %p234 = por %p232, %p233
      %s236 = sadd.s32 %s235, 1
      %p239 = scmp.eq.s32.totalorder %s30, 1
      %p240 = scmp.ne.s32.totalorder %s235, %s237
      %p241 = scmp.eq.s32.totalorder %s30, 0
      %p242 = por %p240, %p241
      %p243 = scmp.ne.s32.totalorder %s235, %s237
      %p244 = scmp.eq.s32.totalorder %s35, 1
      %p245 = por %p243, %p244
      %p246 = scmp.ne.s32.totalorder %s237, %s238
      %p247 = scmp.eq.s32.totalorder %s35, 0
      %p248 = por %p246, %p247
      %p249 = scmp.ne.s32.totalorder %s237, %s238
      %p250 = scmp.eq.s32.totalorder %s36, 1
      %p251 = por %p249, %p250
      %p253 = scmp.ne.s32.totalorder %s238, %s252
      %p254 = scmp.eq.s32.totalorder %s36, 0
      %p255 = por %p253, %p254
      %s257 = sadd.s32 %s256, 1
      %p260 = scmp.eq.s32.totalorder %s30, 1
      %p261 = scmp.ne.s32.totalorder %s256, %s258
      %p262 = scmp.eq.s32.totalorder %s30, 0
      %p263 = por %p261, %p262
      %p264 = scmp.ne.s32.totalorder %s256, %s258
      %p265 = scmp.eq.s32.totalorder %s35, 1
      %p266 = por %p264, %p265
      %p267 = scmp.ne.s32.totalorder %s258, %s259
      %p268 = scmp.eq.s32.totalorder %s35, 0
      %p269 = por %p267, %p268
      %p270 = scmp.ne.s32.totalorder %s258, %s259
      %p271 = scmp.eq.s32.totalorder %s36, 1
      %p272 = por %p270, %p271
      %p274 = scmp.ne.s32.totalorder %s259, %s273
      %p275 = scmp.eq.s32.totalorder %s36, 0
      %p276 = por %p274, %p275
      %s278 = sadd.s32 %s277, 1
      %p281 = scmp.eq.s32.totalorder %s30, 1
      %p282 = scmp.ne.s32.totalorder %s277, %s279
      %p283 = scmp.eq.s32.totalorder %s30, 0
      %p284 = por %p282, %p283
      %p285 = scmp.ne.s32.totalorder %s277, %s279
      %p286 = scmp.eq.s32.totalorder %s35, 1
      %p287 = por %p285, %p286
      %p288 = scmp.ne.s32.totalorder %s279, %s280
      %p289 = scmp.eq.s32.totalorder %s35, 0
      %p290 = por %p288, %p289
      %p291 = scmp.ne.s32.totalorder %s279, %s280
      %p292 = scmp.eq.s32.totalorder %s36, 1
      %p293 = por %p291, %p292
      %p295 = scmp.ne.s32.totalorder %s280, %s294
      %p296 = scmp.eq.s32.totalorder %s36, 0
      %p297 = por %p295, %p296
      %s298 = ssub.s32 %s37, %s49
      %s299 = ssub.s32 %s38, %s45
      %s300 = sor.u32 %s298, %s299
      %p301 = scmp.eq.s32.totalorder %s300, 0
      %s303 = sadd.s32 %s302, 1
      %s304 = scalar_select %p301, %s302, %s303
      %p307 = pneg %p301
      %p308 = scmp.eq.s32.totalorder %s30, 1
      %p309 = por %p307, %p308
      %p310 = scmp.ne.s32.totalorder %s302, %s305
      %p311 = scmp.eq.s32.totalorder %s30, 0
      %p312 = por %p310, %p311
      %p313 = scmp.ne.s32.totalorder %s302, %s305
      %p314 = scmp.eq.s32.totalorder %s35, 1
      %p315 = por %p313, %p314
      %p316 = scmp.ne.s32.totalorder %s305, %s306
      %p317 = scmp.eq.s32.totalorder %s35, 0
      %p318 = por %p316, %p317
      %p319 = scmp.ne.s32.totalorder %s305, %s306
      %p320 = scmp.eq.s32.totalorder %s36, 1
      %p321 = por %p319, %p320
      %p323 = scmp.ne.s32.totalorder %s306, %s322
      %p324 = scmp.eq.s32.totalorder %s36, 0
      %p325 = por %p323, %p324
      %p326 = scmp.le.s32.totalorder 1, %s30
      %p327 = scmp.lt.s32.totalorder %s30, 3
      %p328 = pnand %p326, %p327
      %p329 = pneg %p328
      // Predicated region
      $region9: #{tpu_custom_call.1} parent=5 // pred_check
        _
      $region10: #{tpu_custom_call.1} parent=5 // pred_check_branch
        %331 = sbr.rel (%p328) target = $region12
      $region11: #{tpu_custom_call.1} parent=5 // pred_region
        %s332 = ssub.s32 %s30, 1
        // Predicated region
        $region13: #{tpu_custom_call.1} parent=11 // pred_check
          %p333 = pneg %p143
        $region14: #{tpu_custom_call.1} parent=11 // pred_check_branch
          %335 = sbr.rel (%p333) target = $region16
        $region15: #{tpu_custom_call.1} parent=11 // pred_region
          %s337 = ssub.s32 256, 256
          %338 = vsyncadd [#allocation12], %s337
          %s339 = sshll.u32 [#allocation11], 4
          %s340 = int_to_ptr.vmem [resolvable:$true] %s339
          %345 = dma.hbm_to_vmem [thread:$0]  %s3, 256, %s340, [#allocation12], 64, 64, 4
        $region16: #{tpu_custom_call.1} parent=11 // pred_fallthru
          _
        // Predicated region
        $region17: #{tpu_custom_call.1} parent=11 // pred_check
          %p346 = pneg %p164
        $region18: #{tpu_custom_call.1} parent=11 // pred_check_branch
          %348 = sbr.rel (%p346) target = $region20
        $region19: #{tpu_custom_call.1} parent=11 // pred_region
          %s350 = ssub.s32 16, 16
          %351 = vsyncadd [#allocation12], %s350
          %s353 = sshll.u32 [#allocation13], 4
          %s354 = int_to_ptr.vmem [resolvable:$true] %s353
          %356 = dma.hbm_to_vmem [thread:$0]  %s4, 16, %s354, [#allocation12]
        $region20: #{tpu_custom_call.1} parent=11 // pred_fallthru
          _
        // Predicated region
        $region21: #{tpu_custom_call.1} parent=11 // pred_check
          %p357 = pneg %p185
        $region22: #{tpu_custom_call.1} parent=11 // pred_check_branch
          %359 = sbr.rel (%p357) target = $region24
        $region23: #{tpu_custom_call.1} parent=11 // pred_region
          %s361 = ssub.s32 256, 256
          %362 = vsyncadd [#allocation15], %s361
          %s363 = sshll.u32 [#allocation14], 4
          %s364 = int_to_ptr.vmem [resolvable:$true] %s363
          %369 = dma.hbm_to_vmem [thread:$0]  %s5, 256, %s364, [#allocation15], 64, 64, 4
        $region24: #{tpu_custom_call.1} parent=11 // pred_fallthru
          _
        // Predicated region
        $region25: #{tpu_custom_call.1} parent=11 // pred_check
          %p370 = pneg %p206
        $region26: #{tpu_custom_call.1} parent=11 // pred_check_branch
          %372 = sbr.rel (%p370) target = $region28
        $region27: #{tpu_custom_call.1} parent=11 // pred_region
          %s374 = ssub.s32 16, 16
          %375 = vsyncadd [#allocation15], %s374
          %s377 = sshll.u32 [#allocation16], 4
          %s378 = int_to_ptr.vmem [resolvable:$true] %s377
          %380 = dma.hbm_to_vmem [thread:$0]  %s6, 16, %s378, [#allocation15]
        $region28: #{tpu_custom_call.1} parent=11 // pred_fallthru
          _
        // Predicated region
        $region29: #{tpu_custom_call.1} parent=11 // pred_check
          %p381 = pneg %p227
        $region30: #{tpu_custom_call.1} parent=11 // pred_check_branch
          %383 = sbr.rel (%p381) target = $region32
        $region31: #{tpu_custom_call.1} parent=11 // pred_region
          %s385 = ssub.s32 256, 256
          %386 = vsyncadd [#allocation18], %s385
          %s387 = sshll.u32 [#allocation17], 4
          %s388 = int_to_ptr.vmem [resolvable:$true] %s387
          %393 = dma.hbm_to_vmem [thread:$0]  %s7, 256, %s388, [#allocation18], 64, 64, 4
        $region32: #{tpu_custom_call.1} parent=11 // pred_fallthru
          _
        // Predicated region
        $region33: #{tpu_custom_call.1} parent=11 // pred_check
          %p394 = pneg %p248
        $region34: #{tpu_custom_call.1} parent=11 // pred_check_branch
          %396 = sbr.rel (%p394) target = $region36
        $region35: #{tpu_custom_call.1} parent=11 // pred_region
          %s398 = ssub.s32 16, 16
          %399 = vsyncadd [#allocation18], %s398
          %s401 = sshll.u32 [#allocation19], 4
          %s402 = int_to_ptr.vmem [resolvable:$true] %s401
          %404 = dma.hbm_to_vmem [thread:$0]  %s8, 16, %s402, [#allocation18]
        $region36: #{tpu_custom_call.1} parent=11 // pred_fallthru
          _
        // Predicated region
        $region37: #{tpu_custom_call.1} parent=11 // pred_check
          %p405 = pneg %p269
        $region38: #{tpu_custom_call.1} parent=11 // pred_check_branch
          %407 = sbr.rel (%p405) target = $region40
        $region39: #{tpu_custom_call.1} parent=11 // pred_region
          %s409 = ssub.s32 256, 256
          %410 = vsyncadd [#allocation21], %s409
          %s411 = sshll.u32 [#allocation20], 4
          %s412 = int_to_ptr.vmem [resolvable:$true] %s411
          %417 = dma.hbm_to_vmem [thread:$0]  %s9, 256, %s412, [#allocation21], 64, 64, 4
        $region40: #{tpu_custom_call.1} parent=11 // pred_fallthru
          _
        // Predicated region
        $region41: #{tpu_custom_call.1} parent=11 // pred_check
          %p418 = pneg %p290
        $region42: #{tpu_custom_call.1} parent=11 // pred_check_branch
          %420 = sbr.rel (%p418) target = $region44
        $region43: #{tpu_custom_call.1} parent=11 // pred_region
          %s422 = ssub.s32 16, 16
          %423 = vsyncadd [#allocation21], %s422
          %s425 = sshll.u32 [#allocation22], 4
          %s426 = int_to_ptr.vmem [resolvable:$true] %s425
          %428 = dma.hbm_to_vmem [thread:$0]  %s10, 16, %s426, [#allocation21]
        $region44: #{tpu_custom_call.1} parent=11 // pred_fallthru
          _
      $region12: #{tpu_custom_call.1} parent=5 // pred_fallthru
        _
      %p429 = scmp.lt.s32.totalorder %s30, 2
      // Predicated region
      $region45: #{tpu_custom_call.1} parent=5 // pred_check
        %p430 = pneg %p429
      $region46: #{tpu_custom_call.1} parent=5 // pred_check_branch
        %432 = sbr.rel (%p430) target = $region48
      $region47: #{tpu_custom_call.1} parent=5 // pred_region
        // Predicated region
        $region49: #{tpu_custom_call.1} parent=47 // pred_check
          %p433 = pneg %p64
        $region50: #{tpu_custom_call.1} parent=47 // pred_check_branch
          %435 = sbr.rel (%p433) target = $region52
        $region51: #{tpu_custom_call.1} parent=47 // pred_region
          %s436 = sand.u32 %s54, 1
          %s437 = scalar_lea.sflag [#allocation6], %s436
          %s438 = sand.u32 %s54, 1
          %s439 = smul.addr %s438, 4
          %s440 = scalar_lea.vmem [#allocation5], %s439
          %s442 = ssub.s32 64, 64
          %443 = vsyncadd %s437, %s442
          %s444 = sadd.s32 %s38, %s37
          %s445 = smul.addr %s444, 64
          %s446 = scalar_lea.hbm %s0, %s445
          %s448 = sshll.u32 %s440, 4
          %s449 = int_to_ptr.vmem [resolvable:$true] %s448
          %451 = dma.hbm_to_vmem [thread:$0]  %s446, 64, %s449, %s437
        $region52: #{tpu_custom_call.1} parent=47 // pred_fallthru
          _
        // Predicated region
        $region53: #{tpu_custom_call.1} parent=47 // pred_check
          %p452 = pneg %p90
        $region54: #{tpu_custom_call.1} parent=47 // pred_check_branch
          %454 = sbr.rel (%p452) target = $region56
        $region55: #{tpu_custom_call.1} parent=47 // pred_region
          %s455 = sand.u32 %s30, 1
          %s456 = scalar_lea.sflag [#allocation9], %s455
          %s457 = sand.u32 %s80, 1
          %s458 = smul.addr %s457, 4
          %s459 = scalar_lea.vmem [#allocation8], %s458
          %s461 = ssub.s32 64, 64
          %462 = vsyncadd %s456, %s461
          %s463 = smul.addr %s37, 64
          %s464 = scalar_lea.hbm %s1, %s463
          %s466 = sshll.u32 %s459, 4
          %s467 = int_to_ptr.vmem [resolvable:$true] %s466
          %469 = dma.hbm_to_vmem [thread:$0]  %s464, 64, %s467, %s456
        $region56: #{tpu_custom_call.1} parent=47 // pred_fallthru
          _
        // Predicated region
        $region57: #{tpu_custom_call.1} parent=47 // pred_check
          %p470 = pneg %p116
        $region58: #{tpu_custom_call.1} parent=47 // pred_check_branch
          %472 = sbr.rel (%p470) target = $region60
        $region59: #{tpu_custom_call.1} parent=47 // pred_region
          %s473 = sand.u32 %s30, 1
          %s474 = scalar_lea.sflag [#allocation9], %s473
          %s475 = sand.u32 %s106, 1
          %s476 = smul.addr %s475, 4
          %s477 = scalar_lea.vmem [#allocation10], %s476
          %s479 = ssub.s32 64, 64
          %480 = vsyncadd %s474, %s479
          %s481 = smul.addr %s37, 64
          %s482 = scalar_lea.hbm %s2, %s481
          %s484 = sshll.u32 %s477, 4
          %s485 = int_to_ptr.vmem [resolvable:$true] %s484
          %487 = dma.hbm_to_vmem [thread:$0]  %s482, 64, %s485, %s474
        $region60: #{tpu_custom_call.1} parent=47 // pred_fallthru
          _
      $region48: #{tpu_custom_call.1} parent=5 // pred_fallthru
        _
      %p488 = scmp.le.s32.totalorder 1, %s30
      %p489 = scmp.lt.s32.totalorder %s30, 3
      %p490 = pnand %p488, %p489
      %p491 = pneg %p490
      // Predicated region
      $region61: #{tpu_custom_call.1} parent=5 // pred_check
        _
      $region62: #{tpu_custom_call.1} parent=5 // pred_check_branch
        %493 = sbr.rel (%p490) target = $region64
      $region63: #{tpu_custom_call.1} parent=5 // pred_region
        %s494 = ssub.s32 %s30, 1
        %s495 = sand.u32 %s57, 1
        %s496 = scalar_lea.sflag [#allocation6], %s495
        %s497 = sand.u32 %s57, 1
        %s498 = smul.addr %s497, 4
        %s499 = scalar_lea.vmem [#allocation5], %s498
        // Predicated region
        $region65: #{tpu_custom_call.1} parent=63 // pred_check
          %p500 = pneg %p70
        $region66: #{tpu_custom_call.1} parent=63 // pred_check_branch
          %502 = sbr.rel (%p500) target = $region68
        $region67: #{tpu_custom_call.1} parent=63 // pred_region
          %503 = dma.done %s496, 64
        $region68: #{tpu_custom_call.1} parent=63 // pred_fallthru
          _
        %s504 = sand.u32 %s35, 1
        %s505 = scalar_lea.sflag [#allocation9], %s504
        %s506 = sand.u32 %s83, 1
        %s507 = smul.addr %s506, 4
        %s508 = scalar_lea.vmem [#allocation8], %s507
        // Predicated region
        $region69: #{tpu_custom_call.1} parent=63 // pred_check
          %p509 = pneg %p96
        $region70: #{tpu_custom_call.1} parent=63 // pred_check_branch
          %511 = sbr.rel (%p509) target = $region72
        $region71: #{tpu_custom_call.1} parent=63 // pred_region
          %512 = dma.done %s505, 64
        $region72: #{tpu_custom_call.1} parent=63 // pred_fallthru
          _
        %s513 = sand.u32 %s35, 1
        %s514 = scalar_lea.sflag [#allocation9], %s513
        %s515 = sand.u32 %s109, 1
        %s516 = smul.addr %s515, 4
        %s517 = scalar_lea.vmem [#allocation10], %s516
        // Predicated region
        $region73: #{tpu_custom_call.1} parent=63 // pred_check
          %p518 = pneg %p122
        $region74: #{tpu_custom_call.1} parent=63 // pred_check_branch
          %520 = sbr.rel (%p518) target = $region76
        $region75: #{tpu_custom_call.1} parent=63 // pred_region
          %521 = dma.done %s514, 64
        $region76: #{tpu_custom_call.1} parent=63 // pred_fallthru
          _
        // Predicated region
        $region77: #{tpu_custom_call.1} parent=63 // pred_check
          %p522 = pneg %p143
        $region78: #{tpu_custom_call.1} parent=63 // pred_check_branch
          %524 = sbr.rel (%p522) target = $region80
        $region79: #{tpu_custom_call.1} parent=63 // pred_region
          %525 = dma.done [#allocation12], 256
        $region80: #{tpu_custom_call.1} parent=63 // pred_fallthru
          _
        // Predicated region
        $region81: #{tpu_custom_call.1} parent=63 // pred_check
          %p526 = pneg %p164
        $region82: #{tpu_custom_call.1} parent=63 // pred_check_branch
          %528 = sbr.rel (%p526) target = $region84
        $region83: #{tpu_custom_call.1} parent=63 // pred_region
          %529 = dma.done [#allocation12], 16
        $region84: #{tpu_custom_call.1} parent=63 // pred_fallthru
          _
        // Predicated region
        $region85: #{tpu_custom_call.1} parent=63 // pred_check
          %p530 = pneg %p185
        $region86: #{tpu_custom_call.1} parent=63 // pred_check_branch
          %532 = sbr.rel (%p530) target = $region88
        $region87: #{tpu_custom_call.1} parent=63 // pred_region
          %533 = dma.done [#allocation15], 256
        $region88: #{tpu_custom_call.1} parent=63 // pred_fallthru
          _
        // Predicated region
        $region89: #{tpu_custom_call.1} parent=63 // pred_check
          %p534 = pneg %p206
        $region90: #{tpu_custom_call.1} parent=63 // pred_check_branch
          %536 = sbr.rel (%p534) target = $region92
        $region91: #{tpu_custom_call.1} parent=63 // pred_region
          %537 = dma.done [#allocation15], 16
        $region92: #{tpu_custom_call.1} parent=63 // pred_fallthru
          _
        // Predicated region
        $region93: #{tpu_custom_call.1} parent=63 // pred_check
          %p538 = pneg %p227
        $region94: #{tpu_custom_call.1} parent=63 // pred_check_branch
          %540 = sbr.rel (%p538) target = $region96
        $region95: #{tpu_custom_call.1} parent=63 // pred_region
          %541 = dma.done [#allocation18], 256
        $region96: #{tpu_custom_call.1} parent=63 // pred_fallthru
          _
        // Predicated region
        $region97: #{tpu_custom_call.1} parent=63 // pred_check
          %p542 = pneg %p248
        $region98: #{tpu_custom_call.1} parent=63 // pred_check_branch
          %544 = sbr.rel (%p542) target = $region100
        $region99: #{tpu_custom_call.1} parent=63 // pred_region
          %545 = dma.done [#allocation18], 16
        $region100: #{tpu_custom_call.1} parent=63 // pred_fallthru
          _
        // Predicated region
        $region101: #{tpu_custom_call.1} parent=63 // pred_check
          %p546 = pneg %p269
        $region102: #{tpu_custom_call.1} parent=63 // pred_check_branch
          %548 = sbr.rel (%p546) target = $region104
        $region103: #{tpu_custom_call.1} parent=63 // pred_region
          %549 = dma.done [#allocation21], 256
        $region104: #{tpu_custom_call.1} parent=63 // pred_fallthru
          _
        // Predicated region
        $region105: #{tpu_custom_call.1} parent=63 // pred_check
          %p550 = pneg %p290
        $region106: #{tpu_custom_call.1} parent=63 // pred_check_branch
          %552 = sbr.rel (%p550) target = $region108
        $region107: #{tpu_custom_call.1} parent=63 // pred_region
          %553 = dma.done [#allocation21], 16
        $region108: #{tpu_custom_call.1} parent=63 // pred_fallthru
          _
        %s554 = sand.u32 %s57, 1
        %s555 = scalar_lea.sflag [#allocation6], %s554
        %s556 = sand.u32 %s57, 1
        %s557 = smul.addr %s556, 4
        %s558 = scalar_lea.vmem [#allocation5], %s557
        %p559 = pneg %p70
        %p560 = pneg %p67
        %s561 = sand.u32 %s35, 1
        %s562 = scalar_lea.sflag [#allocation9], %s561
        %s563 = sand.u32 %s83, 1
        %s564 = smul.addr %s563, 4
        %s565 = scalar_lea.vmem [#allocation8], %s564
        %p566 = pneg %p96
        %p567 = pneg %p93
        %s568 = sand.u32 %s35, 1
        %s569 = scalar_lea.sflag [#allocation9], %s568
        %s570 = sand.u32 %s109, 1
        %s571 = smul.addr %s570, 4
        %s572 = scalar_lea.vmem [#allocation10], %s571
        %p573 = pneg %p122
        %p574 = pneg %p119
        %p575 = pneg %p143
        %p576 = pneg %p140
        %p577 = pneg %p164
        %p578 = pneg %p161
        %p579 = pneg %p185
        %p580 = pneg %p182
        %p581 = pneg %p206
        %p582 = pneg %p203
        %p583 = pneg %p227
        %p584 = pneg %p224
        %p585 = pneg %p248
        %p586 = pneg %p245
        %p587 = pneg %p269
        %p588 = pneg %p266
        %p589 = pneg %p290
        %p590 = pneg %p287
        %p591 = pneg %p318
        %p592 = pneg %p315
        %s593 = sand.u32 %s305, 1
        %s594 = scalar_lea.sflag [#allocation7], %s593
        %s595 = sand.u32 %s305, 1
        %s596 = smul.addr %s595, 8
        %s597 = scalar_lea.vmem [#allocation23], %s596
        %p599 = scmp.eq.s32.totalorder %s40, 0
        // Predicated region
        $region109: #{tpu_custom_call.1} parent=63 // pred_check
          %p600 = pneg %p599
        $region110: #{tpu_custom_call.1} parent=63 // pred_check_branch
          %602 = sbr.rel (%p600) target = $region112
        $region111: #{tpu_custom_call.1} parent=63 // pred_region
          %v603 = vld [vmem:[%s508] sm:$0xf]
          %v604 = vld [vmem:[%s517] sm:$0xf]
          %v605 = vld [vmem:[#allocation14] sm:$0xf]
          %v606 = vld [vmem:[#allocation14 + $0x4] sm:$0xf]
          %v607 = vld [vmem:[#allocation14 + $0x8] sm:$0xf]
          %v608 = vld [vmem:[#allocation14 + $0xc] sm:$0xf]
          %v609 = vld [vmem:[#allocation16] sm:$0x1]
          %v611 = vlaneseq
          %v612 = vshrl.u32 %v611, 7
          %v613 = vsub.s32 0, %v612
          %v614 = vrot.slane %v609, %v613
          %v620 = vunpack.c.l.b16 %v605
          %v621 = vunpack.c.l.b16 %v606
          %v622 = vunpack.c.l.b16 %v607
          %v623 = vunpack.c.l.b16 %v608
          %v624 = vpack.c.b16 %v621, %v620
          %v625 = vpack.c.b16 %v623, %v622
          %vm628 = vcmask 261120
          %v630 = vsel %vm628, %v603, 0
          %632 = vmatprep.subr.bf16.mxu0 0
          %633 = vmatpush1.bf16.msra.mxu0 %v624
          %634 = vmatprep.subr.bf16.mxu0 0
          %635 = vmatpush1.bf16.msra.mxu0 %v625
          %636 = vmatprep.subr.bf16.mxu0 0
          %637 = vmatpush1.bf16.msra.mxu0 0
          %638 = vmatprep.subr.bf16.mxu0 0
          %639 = vmatpush1.bf16.msra.mxu0 0
          %640 = vmatprep.subr.bf16.mxu0 0
          %641 = vmatpush1.bf16.msra.mxu0 0
          %642 = vmatprep.subr.bf16.mxu0 0
          %643 = vmatpush1.bf16.msra.mxu0 0
          %644 = vmatprep.subr.bf16.mxu0 0
          %645 = vmatpush1.bf16.msra.mxu0 0
          %646 = vmatprep.subr.bf16.mxu0 0
          %647 = vmatpush1.bf16.msra.mxu0 0
          %648 = vmatprep.subr.bf16.mxu0 0
          %649 = vmatpush1.bf16.msra.mxu0 0
          %650 = vmatprep.subr.bf16.mxu0 0
          %651 = vmatpush1.bf16.msra.mxu0 0
          %652 = vmatprep.subr.bf16.mxu0 0
          %653 = vmatpush1.bf16.msra.mxu0 0
          %654 = vmatprep.subr.bf16.mxu0 0
          %655 = vmatpush1.bf16.msra.mxu0 0
          %656 = vmatprep.subr.bf16.mxu0 0
          %657 = vmatpush1.bf16.msra.mxu0 0
          %658 = vmatprep.subr.bf16.mxu0 0
          %659 = vmatpush1.bf16.msra.mxu0 0
          %660 = vmatprep.subr.bf16.mxu0 0
          %661 = vmatpush1.bf16.msra.mxu0 0
          %662 = vmatprep.subr.bf16.mxu0 0
          %663 = vmatpush1.bf16.msra.mxu0 0
          %664 = vmatprep.mubr.bf16.mxu0 0
          %665 = vmatmul.mubr.bf16.gmra.mrb[0].mxu0 %v630
          %v666 = vpop.f32.mrb[0].mxu0
          %v667 = vadd.f32 %v614, %v666
          %v668 = vpop.f32.mrb[0].mxu0
          %v669 = vpop.f32.mrb[0].mxu0
          %v670 = vpop.f32.mrb[0].mxu0
          %671 = vdwg.mxu0
          %v672 = vpack.c.bf16 %v667, %v667
          %vm673 = vcmask 257024
          %674 = vst.msk [vmem:[#allocation2] sm:$0xf] %vm673, %v672
          %v675 = vld [vmem:[#allocation17] sm:$0xf]
          %v676 = vld [vmem:[#allocation17 + $0x4] sm:$0xf]
          %v677 = vld [vmem:[#allocation17 + $0x8] sm:$0xf]
          %v678 = vld [vmem:[#allocation17 + $0xc] sm:$0xf]
          %v679 = vld [vmem:[#allocation19] sm:$0x1]
          %v681 = vlaneseq
          %v682 = vshrl.u32 %v681, 7
          %v683 = vsub.s32 0, %v682
          %v684 = vrot.slane %v679, %v683
          %v690 = vunpack.c.l.b16 %v675
          %v691 = vunpack.c.l.b16 %v676
          %v692 = vunpack.c.l.b16 %v677
          %v693 = vunpack.c.l.b16 %v678
          %v694 = vpack.c.b16 %v691, %v690
          %v695 = vpack.c.b16 %v693, %v692
          %v699 = vsel %vm628, %v604, 0
          %701 = vmatprep.subr.bf16.mxu0 0
          %702 = vmatpush1.bf16.msra.mxu0 %v694
          %703 = vmatprep.subr.bf16.mxu0 0
          %704 = vmatpush1.bf16.msra.mxu0 %v695
          %705 = vmatprep.subr.bf16.mxu0 0
          %706 = vmatpush1.bf16.msra.mxu0 0
          %707 = vmatprep.subr.bf16.mxu0 0
          %708 = vmatpush1.bf16.msra.mxu0 0
          %709 = vmatprep.subr.bf16.mxu0 0
          %710 = vmatpush1.bf16.msra.mxu0 0
          %711 = vmatprep.subr.bf16.mxu0 0
          %712 = vmatpush1.bf16.msra.mxu0 0
          %713 = vmatprep.subr.bf16.mxu0 0
          %714 = vmatpush1.bf16.msra.mxu0 0
          %715 = vmatprep.subr.bf16.mxu0 0
          %716 = vmatpush1.bf16.msra.mxu0 0
          %717 = vmatprep.subr.bf16.mxu0 0
          %718 = vmatpush1.bf16.msra.mxu0 0
          %719 = vmatprep.subr.bf16.mxu0 0
          %720 = vmatpush1.bf16.msra.mxu0 0
          %721 = vmatprep.subr.bf16.mxu0 0
          %722 = vmatpush1.bf16.msra.mxu0 0
          %723 = vmatprep.subr.bf16.mxu0 0
          %724 = vmatpush1.bf16.msra.mxu0 0
          %725 = vmatprep.subr.bf16.mxu0 0
          %726 = vmatpush1.bf16.msra.mxu0 0
          %727 = vmatprep.subr.bf16.mxu0 0
          %728 = vmatpush1.bf16.msra.mxu0 0
          %729 = vmatprep.subr.bf16.mxu0 0
          %730 = vmatpush1.bf16.msra.mxu0 0
          %731 = vmatprep.subr.bf16.mxu0 0
          %732 = vmatpush1.bf16.msra.mxu0 0
          %733 = vmatprep.mubr.bf16.mxu0 0
          %734 = vmatmul.mubr.bf16.gmra.mrb[0].mxu0 %v699
          %v735 = vpop.f32.mrb[0].mxu0
          %v736 = vadd.f32 %v684, %v735
          %v737 = vpop.f32.mrb[0].mxu0
          %v738 = vpop.f32.mrb[0].mxu0
          %v739 = vpop.f32.mrb[0].mxu0
          %740 = vdwg.mxu0
          %v741 = vpack.c.bf16 %v736, %v736
          %742 = vst.msk [vmem:[#allocation3] sm:$0xf] %vm673, %v741
        $region112: #{tpu_custom_call.1} parent=63 // pred_fallthru
          _
        %v743 = vld [vmem:[%s499] sm:$0xf]
        %v744 = vld [vmem:[#allocation11] sm:$0xf]
        %v745 = vld [vmem:[#allocation11 + $0x4] sm:$0xf]
        %v746 = vld [vmem:[#allocation11 + $0x8] sm:$0xf]
        %v747 = vld [vmem:[#allocation11 + $0xc] sm:$0xf]
        %v748 = vld [vmem:[#allocation13] sm:$0x1]
        %v750 = vlaneseq
        %v751 = vshrl.u32 %v750, 7
        %v752 = vsub.s32 0, %v751
        %v753 = vrot.slane %v748, %v752
        %v759 = vunpack.c.l.b16 %v744
        %v760 = vunpack.c.l.b16 %v745
        %v761 = vunpack.c.l.b16 %v746
        %v762 = vunpack.c.l.b16 %v747
        %v763 = vpack.c.b16 %v760, %v759
        %v764 = vpack.c.b16 %v762, %v761
        %vm767 = vcmask 261120
        %v769 = vsel %vm767, %v743, 0
        %771 = vmatprep.subr.bf16.mxu0 0
        %772 = vmatpush1.bf16.msra.mxu0 %v763
        %773 = vmatprep.subr.bf16.mxu0 0
        %774 = vmatpush1.bf16.msra.mxu0 %v764
        %775 = vmatprep.subr.bf16.mxu0 0
        %776 = vmatpush1.bf16.msra.mxu0 0
        %777 = vmatprep.subr.bf16.mxu0 0
        %778 = vmatpush1.bf16.msra.mxu0 0
        %779 = vmatprep.subr.bf16.mxu0 0
        %780 = vmatpush1.bf16.msra.mxu0 0
        %781 = vmatprep.subr.bf16.mxu0 0
        %782 = vmatpush1.bf16.msra.mxu0 0
        %783 = vmatprep.subr.bf16.mxu0 0
        %784 = vmatpush1.bf16.msra.mxu0 0
        %785 = vmatprep.subr.bf16.mxu0 0
        %786 = vmatpush1.bf16.msra.mxu0 0
        %787 = vmatprep.subr.bf16.mxu0 0
        %788 = vmatpush1.bf16.msra.mxu0 0
        %789 = vmatprep.subr.bf16.mxu0 0
        %790 = vmatpush1.bf16.msra.mxu0 0
        %791 = vmatprep.subr.bf16.mxu0 0
        %792 = vmatpush1.bf16.msra.mxu0 0
        %793 = vmatprep.subr.bf16.mxu0 0
        %794 = vmatpush1.bf16.msra.mxu0 0
        %795 = vmatprep.subr.bf16.mxu0 0
        %796 = vmatpush1.bf16.msra.mxu0 0
        %797 = vmatprep.subr.bf16.mxu0 0
        %798 = vmatpush1.bf16.msra.mxu0 0
        %799 = vmatprep.subr.bf16.mxu0 0
        %800 = vmatpush1.bf16.msra.mxu0 0
        %801 = vmatprep.subr.bf16.mxu0 0
        %802 = vmatpush1.bf16.msra.mxu0 0
        %803 = vmatprep.mubr.bf16.mxu0 0
        %804 = vmatmul.mubr.bf16.gmra.mrb[0].mxu0 %v769
        %v805 = vpop.f32.mrb[0].mxu0
        %v806 = vadd.f32 %v753, %v805
        %v807 = vpop.f32.mrb[0].mxu0
        %v808 = vpop.f32.mrb[0].mxu0
        %v809 = vpop.f32.mrb[0].mxu0
        %810 = vdwg.mxu0
        %v811 = vpack.c.bf16 %v806, %v806
        %v812 = vld [vmem:[#allocation2] sm:$0xf]
        %v813 = vld [vmem:[#allocation3] sm:$0xf]
        %vm814 = vcmask 64512
        %v816 = vsel %vm814, %v811, 0
        %v819 = vsel %vm814, %v812, 0
        %821 = vmatprep.subr.bf16.mxu0 0
        %822 = vmatpush1.bf16.xpose.msra.mxu0 %v819
        %823 = vmatprep.subr.bf16.mxu0 0
        %824 = vmatpush1.bf16.xpose.msra.mxu0 0
        %825 = vmatprep.subr.bf16.mxu0 0
        %826 = vmatpush1.bf16.xpose.msra.mxu0 0
        %827 = vmatprep.subr.bf16.mxu0 0
        %828 = vmatpush1.bf16.xpose.msra.mxu0 0
        %829 = vmatprep.subr.bf16.mxu0 0
        %830 = vmatpush1.bf16.xpose.msra.mxu0 0
        %831 = vmatprep.subr.bf16.mxu0 0
        %832 = vmatpush1.bf16.xpose.msra.mxu0 0
        %833 = vmatprep.subr.bf16.mxu0 0
        %834 = vmatpush1.bf16.xpose.msra.mxu0 0
        %835 = vmatprep.subr.bf16.mxu0 0
        %836 = vmatpush1.bf16.xpose.msra.mxu0 0
        %837 = vmatprep.subr.bf16.mxu0 0
        %838 = vmatpush1.bf16.xpose.msra.mxu0 0
        %839 = vmatprep.subr.bf16.mxu0 0
        %840 = vmatpush1.bf16.xpose.msra.mxu0 0
        %841 = vmatprep.subr.bf16.mxu0 0
        %842 = vmatpush1.bf16.xpose.msra.mxu0 0
        %843 = vmatprep.subr.bf16.mxu0 0
        %844 = vmatpush1.bf16.xpose.msra.mxu0 0
        %845 = vmatprep.subr.bf16.mxu0 0
        %846 = vmatpush1.bf16.xpose.msra.mxu0 0
        %847 = vmatprep.subr.bf16.mxu0 0
        %848 = vmatpush1.bf16.xpose.msra.mxu0 0
        %849 = vmatprep.subr.bf16.mxu0 0
        %850 = vmatpush1.bf16.xpose.msra.mxu0 0
        %851 = vmatprep.subr.bf16.mxu0 0
        %852 = vmatpush1.bf16.xpose.msra.mxu0 0
        %853 = vmatprep.mubr.bf16.mxu0 0
        %854 = vmatmul.mubr.bf16.gmra.mrb[0].mxu0 %v816
        %v855 = vpop.f32.mrb[0].mxu0
        %v856 = vadd.f32 0.0, %v855
        %v857 = vpop.f32.mrb[0].mxu0
        %v858 = vpop.f32.mrb[0].mxu0
        %v859 = vpop.f32.mrb[0].mxu0
        %860 = vdwg.mxu0
        %s861 = smul.u32 %s40, 8
        %v862 = vlaneseq
        %v863 = vshrl.u32 %v862, 7
        %v864 = vstv %s861
        %v865 = vadd.s32 %v864, %v863
        %v866 = vlaneseq
        %v867 = vand.u32 %v866, 127
        %vm868 = vcmp.ge.s32.totalorder %v865, %v867
        %v869 = vsel %vm868, %v856, -1e+09
        %v870 = vsel %vm814, %v869, -inf
        %871 = vmax.xlane.f32.xlu0 %v870
        %v872 = vpop.xlane.xlu0 %871
        %v873 = vsub.f32 -inf, %v872
        %v874 = vmul.f32 %v873, 1.442695
        %v875 = vpow.pop %v874
        %v876 = vsub.f32 %v869, %v872
        %v877 = vmul.f32 %v876, 1.442695
        %v878 = vpow.pop %v877
        %v879 = vmul.f32 %v875, 0.0
        %v880 = vsel %vm814, %v878, 0.0
        %881 = vadd.xlane.f32.xlu0 %v880
        %v882 = vpop.xlane.xlu0 %881
        %v883 = vadd.f32 %v879, %v882
        %v884 = vpack.c.bf16 %v878, %v878
        %v886 = vsel %vm814, %v884, 0
        %vm888 = vcmask 1043456
        %v890 = vsel %vm888, %v813, 0
        %892 = vmatprep.subr.bf16.mxu0 0
        %893 = vmatpush1.bf16.msra.mxu0 %v890
        %894 = vmatprep.subr.bf16.mxu0 0
        %895 = vmatpush1.bf16.msra.mxu0 0
        %896 = vmatprep.subr.bf16.mxu0 0
        %897 = vmatpush1.bf16.msra.mxu0 0
        %898 = vmatprep.subr.bf16.mxu0 0
        %899 = vmatpush1.bf16.msra.mxu0 0
        %900 = vmatprep.subr.bf16.mxu0 0
        %901 = vmatpush1.bf16.msra.mxu0 0
        %902 = vmatprep.subr.bf16.mxu0 0
        %903 = vmatpush1.bf16.msra.mxu0 0
        %904 = vmatprep.subr.bf16.mxu0 0
        %905 = vmatpush1.bf16.msra.mxu0 0
        %906 = vmatprep.subr.bf16.mxu0 0
        %907 = vmatpush1.bf16.msra.mxu0 0
        %908 = vmatprep.subr.bf16.mxu0 0
        %909 = vmatpush1.bf16.msra.mxu0 0
        %910 = vmatprep.subr.bf16.mxu0 0
        %911 = vmatpush1.bf16.msra.mxu0 0
        %912 = vmatprep.subr.bf16.mxu0 0
        %913 = vmatpush1.bf16.msra.mxu0 0
        %914 = vmatprep.subr.bf16.mxu0 0
        %915 = vmatpush1.bf16.msra.mxu0 0
        %916 = vmatprep.subr.bf16.mxu0 0
        %917 = vmatpush1.bf16.msra.mxu0 0
        %918 = vmatprep.subr.bf16.mxu0 0
        %919 = vmatpush1.bf16.msra.mxu0 0
        %920 = vmatprep.subr.bf16.mxu0 0
        %921 = vmatpush1.bf16.msra.mxu0 0
        %922 = vmatprep.subr.bf16.mxu0 0
        %923 = vmatpush1.bf16.msra.mxu0 0
        %924 = vmatprep.mubr.bf16.mxu0 0
        %925 = vmatmul.mubr.bf16.gmra.mrb[0].mxu0 %v886
        %v926 = vpop.f32.mrb[0].mxu0
        %v927 = vadd.f32 0.0, %v926
        %v928 = vpop.f32.mrb[0].mxu0
        %v929 = vpop.f32.mrb[0].mxu0
        %v930 = vpop.f32.mrb[0].mxu0
        %931 = vdwg.mxu0
        %v932 = vadd.f32 %v879, %v927
        %v933 = vrcp.pop %v883
        %v934 = vmul.f32 %v932, %v933
        %v935 = vpack.c.bf16 %v934, %v934
        %vm936 = vcmask 60416
        %937 = vst.msk [vmem:[#allocation4] sm:$0xf] %vm936, %v935
        %v938 = vld [vmem:[#allocation2] sm:$0xf]
        %v939 = vld [vmem:[#allocation3] sm:$0xf]
        %941 = vrot.lane.b32.xlu0 %v811, 120
        %v942 = vpop.permute.xlu0 %941
        %v944 = vunpack.c.l.b16 %v938
        %v945 = vpack.c.b16 %v944, %v944
        %946 = vrot.lane.b32.xlu0 %v945, 120
        %v947 = vpop.permute.xlu0 %946
        %v949 = vsel %vm814, %v942, 0
        %v952 = vsel %vm814, %v947, 0
        %954 = vmatprep.subr.bf16.mxu0 0
        %955 = vmatpush1.bf16.xpose.msra.mxu0 %v952
        %956 = vmatprep.subr.bf16.mxu0 0
        %957 = vmatpush1.bf16.xpose.msra.mxu0 0
        %958 = vmatprep.subr.bf16.mxu0 0
        %959 = vmatpush1.bf16.xpose.msra.mxu0 0
        %960 = vmatprep.subr.bf16.mxu0 0
        %961 = vmatpush1.bf16.xpose.msra.mxu0 0
        %962 = vmatprep.subr.bf16.mxu0 0
        %963 = vmatpush1.bf16.xpose.msra.mxu0 0
        %964 = vmatprep.subr.bf16.mxu0 0
        %965 = vmatpush1.bf16.xpose.msra.mxu0 0
        %966 = vmatprep.subr.bf16.mxu0 0
        %967 = vmatpush1.bf16.xpose.msra.mxu0 0
        %968 = vmatprep.subr.bf16.mxu0 0
        %969 = vmatpush1.bf16.xpose.msra.mxu0 0
        %970 = vmatprep.subr.bf16.mxu0 0
        %971 = vmatpush1.bf16.xpose.msra.mxu0 0
        %972 = vmatprep.subr.bf16.mxu0 0
        %973 = vmatpush1.bf16.xpose.msra.mxu0 0
        %974 = vmatprep.subr.bf16.mxu0 0
        %975 = vmatpush1.bf16.xpose.msra.mxu0 0
        %976 = vmatprep.subr.bf16.mxu0 0
        %977 = vmatpush1.bf16.xpose.msra.mxu0 0
        %978 = vmatprep.subr.bf16.mxu0 0
        %979 = vmatpush1.bf16.xpose.msra.mxu0 0
        %980 = vmatprep.subr.bf16.mxu0 0
        %981 = vmatpush1.bf16.xpose.msra.mxu0 0
        %982 = vmatprep.subr.bf16.mxu0 0
        %983 = vmatpush1.bf16.xpose.msra.mxu0 0
        %984 = vmatprep.subr.bf16.mxu0 0
        %985 = vmatpush1.bf16.xpose.msra.mxu0 0
        %986 = vmatprep.mubr.bf16.mxu0 0
        %987 = vmatmul.mubr.bf16.gmra.mrb[0].mxu0 %v949
        %v988 = vpop.f32.mrb[0].mxu0
        %v989 = vadd.f32 0.0, %v988
        %v990 = vpop.f32.mrb[0].mxu0
        %v991 = vpop.f32.mrb[0].mxu0
        %v992 = vpop.f32.mrb[0].mxu0
        %993 = vdwg.mxu0
        %v994 = vsel %vm868, %v989, -1e+09
        %v995 = vsel %vm814, %v994, -inf
        %996 = vmax.xlane.f32.xlu0 %v995
        %v997 = vpop.xlane.xlu0 %996
        %v998 = vsub.f32 -inf, %v997
        %v999 = vmul.f32 %v998, 1.442695
        %v1000 = vpow.pop %v999
        %v1001 = vsub.f32 %v994, %v997
        %v1002 = vmul.f32 %v1001, 1.442695
        %v1003 = vpow.pop %v1002
        %v1004 = vmul.f32 %v1000, 0.0
        %v1005 = vsel %vm814, %v1003, 0.0
        %1006 = vadd.xlane.f32.xlu0 %v1005
        %v1007 = vpop.xlane.xlu0 %1006
        %v1008 = vadd.f32 %v1004, %v1007
        %v1009 = vpack.c.bf16 %v1003, %v1003
        %v1011 = vunpack.c.l.b16 %v939
        %v1012 = vpack.c.b16 %v1011, %v1011
        %1013 = vrot.lane.b32.xlu0 %v1012, 120
        %v1014 = vpop.permute.xlu0 %1013
        %v1016 = vsel %vm814, %v1009, 0
        %v1019 = vsel %vm888, %v1014, 0
        %1021 = vmatprep.subr.bf16.mxu0 0
        %1022 = vmatpush1.bf16.msra.mxu0 %v1019
        %1023 = vmatprep.subr.bf16.mxu0 0
        %1024 = vmatpush1.bf16.msra.mxu0 0
        %1025 = vmatprep.subr.bf16.mxu0 0
        %1026 = vmatpush1.bf16.msra.mxu0 0
        %1027 = vmatprep.subr.bf16.mxu0 0
        %1028 = vmatpush1.bf16.msra.mxu0 0
        %1029 = vmatprep.subr.bf16.mxu0 0
        %1030 = vmatpush1.bf16.msra.mxu0 0
        %1031 = vmatprep.subr.bf16.mxu0 0
        %1032 = vmatpush1.bf16.msra.mxu0 0
        %1033 = vmatprep.subr.bf16.mxu0 0
        %1034 = vmatpush1.bf16.msra.mxu0 0
        %1035 = vmatprep.subr.bf16.mxu0 0
        %1036 = vmatpush1.bf16.msra.mxu0 0
        %1037 = vmatprep.subr.bf16.mxu0 0
        %1038 = vmatpush1.bf16.msra.mxu0 0
        %1039 = vmatprep.subr.bf16.mxu0 0
        %1040 = vmatpush1.bf16.msra.mxu0 0
        %1041 = vmatprep.subr.bf16.mxu0 0
        %1042 = vmatpush1.bf16.msra.mxu0 0
        %1043 = vmatprep.subr.bf16.mxu0 0
        %1044 = vmatpush1.bf16.msra.mxu0 0
        %1045 = vmatprep.subr.bf16.mxu0 0
        %1046 = vmatpush1.bf16.msra.mxu0 0
        %1047 = vmatprep.subr.bf16.mxu0 0
        %1048 = vmatpush1.bf16.msra.mxu0 0
        %1049 = vmatprep.subr.bf16.mxu0 0
        %1050 = vmatpush1.bf16.msra.mxu0 0
        %1051 = vmatprep.subr.bf16.mxu0 0
        %1052 = vmatpush1.bf16.msra.mxu0 0
        %1053 = vmatprep.mubr.bf16.mxu0 0
        %1054 = vmatmul.mubr.bf16.gmra.mrb[0].mxu0 %v1016
        %v1055 = vpop.f32.mrb[0].mxu0
        %v1056 = vadd.f32 0.0, %v1055
        %v1057 = vpop.f32.mrb[0].mxu0
        %v1058 = vpop.f32.mrb[0].mxu0
        %v1059 = vpop.f32.mrb[0].mxu0
        %1060 = vdwg.mxu0
        %v1061 = vadd.f32 %v1004, %v1056
        %v1062 = vrcp.pop %v1008
        %v1063 = vmul.f32 %v1061, %v1062
        %v1064 = vpack.c.bf16 %v1063, %v1063
        %v1066 = vunpack.c.l.b16 %v1064
        %v1067 = vpack.c.b16 %v1066, %v1066
        %1068 = vrot.lane.b32.xlu0 %v1067, 8
        %v1069 = vpop.permute.xlu0 %1068
        %vm1071 = vcmask 126016
        %1072 = vst.msk [vmem:[#allocation4] sm:$0xf] %vm1071, %v1069
        %v1073 = vld [vmem:[#allocation2] sm:$0xf]
        %v1074 = vld [vmem:[#allocation3] sm:$0xf]
        %1075 = vrot.lane.b32.xlu0 %v811, 112
        %v1076 = vpop.permute.xlu0 %1075
        %v1078 = vunpack.c.l.b16 %v1073
        %v1079 = vpack.c.b16 %v1078, %v1078
        %1080 = vrot.lane.b32.xlu0 %v1079, 112
        %v1081 = vpop.permute.xlu0 %1080
        %v1083 = vsel %vm814, %v1076, 0
        %v1086 = vsel %vm814, %v1081, 0
        %1088 = vmatprep.subr.bf16.mxu0 0
        %1089 = vmatpush1.bf16.xpose.msra.mxu0 %v1086
        %1090 = vmatprep.subr.bf16.mxu0 0
        %1091 = vmatpush1.bf16.xpose.msra.mxu0 0
        %1092 = vmatprep.subr.bf16.mxu0 0
        %1093 = vmatpush1.bf16.xpose.msra.mxu0 0
        %1094 = vmatprep.subr.bf16.mxu0 0
        %1095 = vmatpush1.bf16.xpose.msra.mxu0 0
        %1096 = vmatprep.subr.bf16.mxu0 0
        %1097 = vmatpush1.bf16.xpose.msra.mxu0 0
        %1098 = vmatprep.subr.bf16.mxu0 0
        %1099 = vmatpush1.bf16.xpose.msra.mxu0 0
        %1100 = vmatprep.subr.bf16.mxu0 0
        %1101 = vmatpush1.bf16.xpose.msra.mxu0 0
        %1102 = vmatprep.subr.bf16.mxu0 0
        %1103 = vmatpush1.bf16.xpose.msra.mxu0 0
        %1104 = vmatprep.subr.bf16.mxu0 0
        %1105 = vmatpush1.bf16.xpose.msra.mxu0 0
        %1106 = vmatprep.subr.bf16.mxu0 0
        %1107 = vmatpush1.bf16.xpose.msra.mxu0 0
        %1108 = vmatprep.subr.bf16.mxu0 0
        %1109 = vmatpush1.bf16.xpose.msra.mxu0 0
        %1110 = vmatprep.subr.bf16.mxu0 0
        %1111 = vmatpush1.bf16.xpose.msra.mxu0 0
        %1112 = vmatprep.subr.bf16.mxu0 0
        %1113 = vmatpush1.bf16.xpose.msra.mxu0 0
        %1114 = vmatprep.subr.bf16.mxu0 0
        %1115 = vmatpush1.bf16.xpose.msra.mxu0 0
        %1116 = vmatprep.subr.bf16.mxu0 0
        %1117 = vmatpush1.bf16.xpose.msra.mxu0 0
        %1118 = vmatprep.subr.bf16.mxu0 0
        %1119 = vmatpush1.bf16.xpose.msra.mxu0 0
        %1120 = vmatprep.mubr.bf16.mxu0 0
        %1121 = vmatmul.mubr.bf16.gmra.mrb[0].mxu0 %v1083
        %v1122 = vpop.f32.mrb[0].mxu0
        %v1123 = vadd.f32 0.0, %v1122
        %v1124 = vpop.f32.mrb[0].mxu0
        %v1125 = vpop.f32.mrb[0].mxu0
        %v1126 = vpop.f32.mrb[0].mxu0
        %1127 = vdwg.mxu0
        %v1128 = vsel %vm868, %v1123, -1e+09
        %v1129 = vsel %vm814, %v1128, -inf
        %1130 = vmax.xlane.f32.xlu0 %v1129
        %v1131 = vpop.xlane.xlu0 %1130
        %v1132 = vsub.f32 -inf, %v1131
        %v1133 = vmul.f32 %v1132, 1.442695
        %v1134 = vpow.pop %v1133
        %v1135 = vsub.f32 %v1128, %v1131
        %v1136 = vmul.f32 %v1135, 1.442695
        %v1137 = vpow.pop %v1136
        %v1138 = vmul.f32 %v1134, 0.0
        %v1139 = vsel %vm814, %v1137, 0.0
        %1140 = vadd.xlane.f32.xlu0 %v1139
        %v1141 = vpop.xlane.xlu0 %1140
        %v1142 = vadd.f32 %v1138, %v1141
        %v1143 = vpack.c.bf16 %v1137, %v1137
        %v1145 = vunpack.c.l.b16 %v1074
        %v1146 = vpack.c.b16 %v1145, %v1145
        %1147 = vrot.lane.b32.xlu0 %v1146, 112
        %v1148 = vpop.permute.xlu0 %1147
        %v1150 = vsel %vm814, %v1143, 0
        %v1153 = vsel %vm888, %v1148, 0
        %1155 = vmatprep.subr.bf16.mxu0 0
        %1156 = vmatpush1.bf16.msra.mxu0 %v1153
        %1157 = vmatprep.subr.bf16.mxu0 0
        %1158 = vmatpush1.bf16.msra.mxu0 0
        %1159 = vmatprep.subr.bf16.mxu0 0
        %1160 = vmatpush1.bf16.msra.mxu0 0
        %1161 = vmatprep.subr.bf16.mxu0 0
        %1162 = vmatpush1.bf16.msra.mxu0 0
        %1163 = vmatprep.subr.bf16.mxu0 0
        %1164 = vmatpush1.bf16.msra.mxu0 0
        %1165 = vmatprep.subr.bf16.mxu0 0
        %1166 = vmatpush1.bf16.msra.mxu0 0
        %1167 = vmatprep.subr.bf16.mxu0 0
        %1168 = vmatpush1.bf16.msra.mxu0 0
        %1169 = vmatprep.subr.bf16.mxu0 0
        %1170 = vmatpush1.bf16.msra.mxu0 0
        %1171 = vmatprep.subr.bf16.mxu0 0
        %1172 = vmatpush1.bf16.msra.mxu0 0
        %1173 = vmatprep.subr.bf16.mxu0 0
        %1174 = vmatpush1.bf16.msra.mxu0 0
        %1175 = vmatprep.subr.bf16.mxu0 0
        %1176 = vmatpush1.bf16.msra.mxu0 0
        %1177 = vmatprep.subr.bf16.mxu0 0
        %1178 = vmatpush1.bf16.msra.mxu0 0
        %1179 = vmatprep.subr.bf16.mxu0 0
        %1180 = vmatpush1.bf16.msra.mxu0 0
        %1181 = vmatprep.subr.bf16.mxu0 0
        %1182 = vmatpush1.bf16.msra.mxu0 0
        %1183 = vmatprep.subr.bf16.mxu0 0
        %1184 = vmatpush1.bf16.msra.mxu0 0
        %1185 = vmatprep.subr.bf16.mxu0 0
        %1186 = vmatpush1.bf16.msra.mxu0 0
        %1187 = vmatprep.mubr.bf16.mxu0 0
        %1188 = vmatmul.mubr.bf16.gmra.mrb[0].mxu0 %v1150
        %v1189 = vpop.f32.mrb[0].mxu0
        %v1190 = vadd.f32 0.0, %v1189
        %v1191 = vpop.f32.mrb[0].mxu0
        %v1192 = vpop.f32.mrb[0].mxu0
        %v1193 = vpop.f32.mrb[0].mxu0
        %1194 = vdwg.mxu0
        %v1195 = vadd.f32 %v1138, %v1190
        %v1196 = vrcp.pop %v1142
        %v1197 = vmul.f32 %v1195, %v1196
        %v1198 = vpack.c.bf16 %v1197, %v1197
        %v1200 = vunpack.c.l.b16 %v1198
        %v1201 = vpack.c.b16 %v1200, %v1200
        %1202 = vrot.lane.b32.xlu0 %v1201, 16
        %v1203 = vpop.permute.xlu0 %1202
        %vm1205 = vcmask 191616
        %1206 = vst.msk [vmem:[#allocation4] sm:$0xf] %vm1205, %v1203
        %v1207 = vld [vmem:[#allocation2] sm:$0xf]
        %v1208 = vld [vmem:[#allocation3] sm:$0xf]
        %1209 = vrot.lane.b32.xlu0 %v811, 104
        %v1210 = vpop.permute.xlu0 %1209
        %v1212 = vunpack.c.l.b16 %v1207
        %v1213 = vpack.c.b16 %v1212, %v1212
        %1214 = vrot.lane.b32.xlu0 %v1213, 104
        %v1215 = vpop.permute.xlu0 %1214
        %v1217 = vsel %vm814, %v1210, 0
        %v1220 = vsel %vm814, %v1215, 0
        %1222 = vmatprep.subr.bf16.mxu0 0
        %1223 = vmatpush1.bf16.xpose.msra.mxu0 %v1220
        %1224 = vmatprep.subr.bf16.mxu0 0
        %1225 = vmatpush1.bf16.xpose.msra.mxu0 0
        %1226 = vmatprep.subr.bf16.mxu0 0
        %1227 = vmatpush1.bf16.xpose.msra.mxu0 0
        %1228 = vmatprep.subr.bf16.mxu0 0
        %1229 = vmatpush1.bf16.xpose.msra.mxu0 0
        %1230 = vmatprep.subr.bf16.mxu0 0
        %1231 = vmatpush1.bf16.xpose.msra.mxu0 0
        %1232 = vmatprep.subr.bf16.mxu0 0
        %1233 = vmatpush1.bf16.xpose.msra.mxu0 0
        %1234 = vmatprep.subr.bf16.mxu0 0
        %1235 = vmatpush1.bf16.xpose.msra.mxu0 0
        %1236 = vmatprep.subr.bf16.mxu0 0
        %1237 = vmatpush1.bf16.xpose.msra.mxu0 0
        %1238 = vmatprep.subr.bf16.mxu0 0
        %1239 = vmatpush1.bf16.xpose.msra.mxu0 0
        %1240 = vmatprep.subr.bf16.mxu0 0
        %1241 = vmatpush1.bf16.xpose.msra.mxu0 0
        %1242 = vmatprep.subr.bf16.mxu0 0
        %1243 = vmatpush1.bf16.xpose.msra.mxu0 0
        %1244 = vmatprep.subr.bf16.mxu0 0
        %1245 = vmatpush1.bf16.xpose.msra.mxu0 0
        %1246 = vmatprep.subr.bf16.mxu0 0
        %1247 = vmatpush1.bf16.xpose.msra.mxu0 0
        %1248 = vmatprep.subr.bf16.mxu0 0
        %1249 = vmatpush1.bf16.xpose.msra.mxu0 0
        %1250 = vmatprep.subr.bf16.mxu0 0
        %1251 = vmatpush1.bf16.xpose.msra.mxu0 0
        %1252 = vmatprep.subr.bf16.mxu0 0
        %1253 = vmatpush1.bf16.xpose.msra.mxu0 0
        %1254 = vmatprep.mubr.bf16.mxu0 0
        %1255 = vmatmul.mubr.bf16.gmra.mrb[0].mxu0 %v1217
        %v1256 = vpop.f32.mrb[0].mxu0
        %v1257 = vadd.f32 0.0, %v1256
        %v1258 = vpop.f32.mrb[0].mxu0
        %v1259 = vpop.f32.mrb[0].mxu0
        %v1260 = vpop.f32.mrb[0].mxu0
        %1261 = vdwg.mxu0
        %v1262 = vsel %vm868, %v1257, -1e+09
        %v1263 = vsel %vm814, %v1262, -inf
        %1264 = vmax.xlane.f32.xlu0 %v1263
        %v1265 = vpop.xlane.xlu0 %1264
        %v1266 = vsub.f32 -inf, %v1265
        %v1267 = vmul.f32 %v1266, 1.442695
        %v1268 = vpow.pop %v1267
        %v1269 = vsub.f32 %v1262, %v1265
        %v1270 = vmul.f32 %v1269, 1.442695
        %v1271 = vpow.pop %v1270
        %v1272 = vmul.f32 %v1268, 0.0
        %v1273 = vsel %vm814, %v1271, 0.0
        %1274 = vadd.xlane.f32.xlu0 %v1273
        %v1275 = vpop.xlane.xlu0 %1274
        %v1276 = vadd.f32 %v1272, %v1275
        %v1277 = vpack.c.bf16 %v1271, %v1271
        %v1279 = vunpack.c.l.b16 %v1208
        %v1280 = vpack.c.b16 %v1279, %v1279
        %1281 = vrot.lane.b32.xlu0 %v1280, 104
        %v1282 = vpop.permute.xlu0 %1281
        %v1284 = vsel %vm814, %v1277, 0
        %v1287 = vsel %vm888, %v1282, 0
        %1289 = vmatprep.subr.bf16.mxu0 0
        %1290 = vmatpush1.bf16.msra.mxu0 %v1287
        %1291 = vmatprep.subr.bf16.mxu0 0
        %1292 = vmatpush1.bf16.msra.mxu0 0
        %1293 = vmatprep.subr.bf16.mxu0 0
        %1294 = vmatpush1.bf16.msra.mxu0 0
        %1295 = vmatprep.subr.bf16.mxu0 0
        %1296 = vmatpush1.bf16.msra.mxu0 0
        %1297 = vmatprep.subr.bf16.mxu0 0
        %1298 = vmatpush1.bf16.msra.mxu0 0
        %1299 = vmatprep.subr.bf16.mxu0 0
        %1300 = vmatpush1.bf16.msra.mxu0 0
        %1301 = vmatprep.subr.bf16.mxu0 0
        %1302 = vmatpush1.bf16.msra.mxu0 0
        %1303 = vmatprep.subr.bf16.mxu0 0
        %1304 = vmatpush1.bf16.msra.mxu0 0
        %1305 = vmatprep.subr.bf16.mxu0 0
        %1306 = vmatpush1.bf16.msra.mxu0 0
        %1307 = vmatprep.subr.bf16.mxu0 0
        %1308 = vmatpush1.bf16.msra.mxu0 0
        %1309 = vmatprep.subr.bf16.mxu0 0
        %1310 = vmatpush1.bf16.msra.mxu0 0
        %1311 = vmatprep.subr.bf16.mxu0 0
        %1312 = vmatpush1.bf16.msra.mxu0 0
        %1313 = vmatprep.subr.bf16.mxu0 0
        %1314 = vmatpush1.bf16.msra.mxu0 0
        %1315 = vmatprep.subr.bf16.mxu0 0
        %1316 = vmatpush1.bf16.msra.mxu0 0
        %1317 = vmatprep.subr.bf16.mxu0 0
        %1318 = vmatpush1.bf16.msra.mxu0 0
        %1319 = vmatprep.subr.bf16.mxu0 0
        %1320 = vmatpush1.bf16.msra.mxu0 0
        %1321 = vmatprep.mubr.bf16.mxu0 0
        %1322 = vmatmul.mubr.bf16.gmra.mrb[0].mxu0 %v1284
        %v1323 = vpop.f32.mrb[0].mxu0
        %v1324 = vadd.f32 0.0, %v1323
        %v1325 = vpop.f32.mrb[0].mxu0
        %v1326 = vpop.f32.mrb[0].mxu0
        %v1327 = vpop.f32.mrb[0].mxu0
        %1328 = vdwg.mxu0
        %v1329 = vadd.f32 %v1272, %v1324
        %v1330 = vrcp.pop %v1276
        %v1331 = vmul.f32 %v1329, %v1330
        %v1332 = vpack.c.bf16 %v1331, %v1331
        %v1334 = vunpack.c.l.b16 %v1332
        %v1335 = vpack.c.b16 %v1334, %v1334
        %1336 = vrot.lane.b32.xlu0 %v1335, 24
        %v1337 = vpop.permute.xlu0 %1336
        %vm1339 = vcmask 257216
        %1340 = vst.msk [vmem:[#allocation4] sm:$0xf] %vm1339, %v1337
        %v1341 = vld [vmem:[#allocation4] sm:$0xf]
        %v1342 = vld [vmem:[#allocation20] sm:$0xf]
        %v1343 = vld [vmem:[#allocation20 + $0x4] sm:$0xf]
        %v1344 = vld [vmem:[#allocation20 + $0x8] sm:$0xf]
        %v1345 = vld [vmem:[#allocation20 + $0xc] sm:$0xf]
        %v1346 = vld [vmem:[#allocation22] sm:$0x1]
        %v1348 = vlaneseq
        %v1349 = vshrl.u32 %v1348, 7
        %v1350 = vsub.s32 0, %v1349
        %v1351 = vrot.slane %v1346, %v1350
        %v1357 = vunpack.c.l.b16 %v1342
        %v1358 = vunpack.c.l.b16 %v1343
        %v1359 = vunpack.c.l.b16 %v1344
        %v1360 = vunpack.c.l.b16 %v1345
        %v1361 = vpack.c.b16 %v1358, %v1357
        %v1362 = vpack.c.b16 %v1360, %v1359
        %v1366 = vsel %vm767, %v1341, 0
        %1368 = vmatprep.subr.bf16.mxu0 0
        %1369 = vmatpush1.bf16.msra.mxu0 %v1361
        %1370 = vmatprep.subr.bf16.mxu0 0
        %1371 = vmatpush1.bf16.msra.mxu0 %v1362
        %1372 = vmatprep.subr.bf16.mxu0 0
        %1373 = vmatpush1.bf16.msra.mxu0 0
        %1374 = vmatprep.subr.bf16.mxu0 0
        %1375 = vmatpush1.bf16.msra.mxu0 0
        %1376 = vmatprep.subr.bf16.mxu0 0
        %1377 = vmatpush1.bf16.msra.mxu0 0
        %1378 = vmatprep.subr.bf16.mxu0 0
        %1379 = vmatpush1.bf16.msra.mxu0 0
        %1380 = vmatprep.subr.bf16.mxu0 0
        %1381 = vmatpush1.bf16.msra.mxu0 0
        %1382 = vmatprep.subr.bf16.mxu0 0
        %1383 = vmatpush1.bf16.msra.mxu0 0
        %1384 = vmatprep.subr.bf16.mxu0 0
        %1385 = vmatpush1.bf16.msra.mxu0 0
        %1386 = vmatprep.subr.bf16.mxu0 0
        %1387 = vmatpush1.bf16.msra.mxu0 0
        %1388 = vmatprep.subr.bf16.mxu0 0
        %1389 = vmatpush1.bf16.msra.mxu0 0
        %1390 = vmatprep.subr.bf16.mxu0 0
        %1391 = vmatpush1.bf16.msra.mxu0 0
        %1392 = vmatprep.subr.bf16.mxu0 0
        %1393 = vmatpush1.bf16.msra.mxu0 0
        %1394 = vmatprep.subr.bf16.mxu0 0
        %1395 = vmatpush1.bf16.msra.mxu0 0
        %1396 = vmatprep.subr.bf16.mxu0 0
        %1397 = vmatpush1.bf16.msra.mxu0 0
        %1398 = vmatprep.subr.bf16.mxu0 0
        %1399 = vmatpush1.bf16.msra.mxu0 0
        %1400 = vmatprep.mubr.bf16.mxu0 0
        %1401 = vmatmul.mubr.bf16.gmra.mrb[0].mxu0 %v1366
        %v1402 = vpop.f32.mrb[0].mxu0
        %v1403 = vadd.f32 %v1351, %v1402
        %v1404 = vpop.f32.mrb[0].mxu0
        %v1405 = vpop.f32.mrb[0].mxu0
        %v1406 = vpop.f32.mrb[0].mxu0
        %1407 = vdwg.mxu0
        %1408 = vst.msk [vmem:[%s597] sm:$0xff] %vm767, %v1403
        %s1409 = sand.u32 %s305, 1
        %s1410 = scalar_lea.sflag [#allocation7], %s1409
        %s1411 = sand.u32 %s305, 1
        %s1412 = smul.addr %s1411, 8
        %s1413 = scalar_lea.vmem [#allocation23], %s1412
        // Predicated region
        $region113: #{tpu_custom_call.1} parent=63 // pred_check
          %p1414 = pneg %p315
        $region114: #{tpu_custom_call.1} parent=63 // pred_check_branch
          %1416 = sbr.rel (%p1414) target = $region116
        $region115: #{tpu_custom_call.1} parent=63 // pred_region
          %s1418 = ssub.s32 128, 128
          %1419 = vsyncadd %s1410, %s1418
          %s1420 = sadd.s32 %s40, %s39
          %s1421 = smul.addr %s1420, 128
          %s1422 = scalar_lea.hbm %s11, %s1421
          %s1424 = sshll.u32 %s1413, 4
          %s1425 = int_to_ptr.vmem [resolvable:$true] %s1424
          %1427 = dma.vmem_to_hbm [thread:$0]  %s1425, 128, %s1422, %s1410
        $region116: #{tpu_custom_call.1} parent=63 // pred_fallthru
          _
      $region64: #{tpu_custom_call.1} parent=5 // pred_fallthru
        _
      %p1428 = scmp.le.s32.totalorder 2, %s30
      // Predicated region
      $region117: #{tpu_custom_call.1} parent=5 // pred_check
        %p1429 = pneg %p1428
      $region118: #{tpu_custom_call.1} parent=5 // pred_check_branch
        %1431 = sbr.rel (%p1429) target = $region120
      $region119: #{tpu_custom_call.1} parent=5 // pred_region
        %s1432 = ssub.s32 %s30, 2
        // Predicated region
        $region121: #{tpu_custom_call.1} parent=119 // pred_check
          %p1433 = pneg %p321
        $region122: #{tpu_custom_call.1} parent=119 // pred_check_branch
          %1435 = sbr.rel (%p1433) target = $region124
        $region123: #{tpu_custom_call.1} parent=119 // pred_region
          %s1436 = sand.u32 %s306, 1
          %s1437 = scalar_lea.sflag [#allocation7], %s1436
          %s1438 = sand.u32 %s306, 1
          %s1439 = smul.addr %s1438, 8
          %s1440 = scalar_lea.vmem [#allocation23], %s1439
          %1441 = dma.done %s1437, 128
        $region124: #{tpu_custom_call.1} parent=119 // pred_fallthru
          _
      $region120: #{tpu_custom_call.1} parent=5 // pred_fallthru
        _
    $region6: #{tpu_custom_call.1} parent=1 // loop_footer
      %s34 = sadd.s32 1, %s30
    $region7: #{tpu_custom_call.1} parent=1 // loop_footer_branch
      %29 = sbr.rel target = $region3
    $region8: #{tpu_custom_call.1} parent=1 // loop_exit
      _
    %1442 = vsyncpa [#allocation6], 1
    %s1443 = scalar_lea.sflag [#allocation6], 1
    %1444 = vsyncpa %s1443, 1
    %1445 = vsyncpa [#allocation9], 1
    %s1446 = scalar_lea.sflag [#allocation9], 1
    %1447 = vsyncpa %s1446, 1
    %1448 = vsyncpa [#allocation12], 1
    %1449 = vsyncpa [#allocation15], 1
    %1450 = vsyncpa [#allocation18], 1
    %1451 = vsyncpa [#allocation21], 1
    %1452 = vsyncpa [#allocation7], 1
    %s1453 = scalar_lea.sflag [#allocation7], 1
    %1454 = vsyncpa %s1453, 1

</llo_original>
